<compile_context>
chip_gen: v5e
topology: v5e:2x2
jax: 0.10.0
libtpu: 0.0.40
codegen_flags: <defaults>
</compile_context>

<pallas_src>
import functools

import jax
import jax.numpy as jnp
from jax.experimental import pallas as pl
from jax.experimental.pallas import tpu as pltpu

SCALE = 0.5 ** 0.5  # torch.sqrt(torch.FloatTensor([0.5]))
LANE = 128


def _round_up(n, m):
    return ((n + m - 1) // m) * m


def _pad2(w, rows, cols):
    return jnp.pad(w, ((0, rows - w.shape[0]), (0, cols - w.shape[1])))


def _invariant_spec(shape, index_map):
    # Grid-invariant weights: single-buffered (their block index never changes, so the
    # default double-buffer only wastes VMEM — matters most on v7x's 64 MiB).
    try:
        return pl.BlockSpec(shape, index_map, pipeline_mode=pl.Buffered(1))
    except Exception:  # pragma: no cover — older jax without pipeline_mode support
        return pl.BlockSpec(shape, index_map)


# ----------------------------------------------------------------------------
# Fused decoder kernel: grid = (batch_block, layer).
# ----------------------------------------------------------------------------
def _decoder_layer_kernel(
        tpe_ref, encc_ref, encz_ref,
        w_in_ref, b_in_ref,
        wca_ref, wcg_ref, bca_ref, bcg_ref, pada_ref, padg_ref,
        wh2e_ref, bh2e_ref, we2h_ref, be2h_ref,
        wout_ref, bout_ref, wfc_ref, bfc_ref,
        out_ref, attn_ref,
        x_scr,
        *, n_layers, kernel_size, src_len, bb, t_len):
    k = kernel_size
    l = pl.program_id(1)
    bt = bb * t_len
    e_pad = tpe_ref.shape[-1]
    h_pad = x_scr.shape[-1]
    s_pad = attn_ref.shape[-1]

    tpe = tpe_ref[...]                                  # [Bb, T, E_pad]  f32
    tpe_flat = tpe.reshape(bt, e_pad)                   # [Bb*T, E_pad]

    # ---- embedding_to_hidden (once per batch block, layer 0 only) ----------------
    @pl.when(l == 0)
    def _():
        x_scr[...] = (jnp.dot(tpe_flat.astype(jnp.bfloat16), w_in_ref[...],
                              preferred_element_type=jnp.float32) + b_in_ref[...])

    x = x_scr[...]                                      # [Bb*T, H_pad]   f32 residual stream
    x_bf = x.astype(jnp.bfloat16)

    # Within-sequence time index of every flattened row (for the causal-pad overwrite).
    t_idx = jax.lax.broadcasted_iota(
        jnp.int32, (bb, t_len, h_pad), 1).reshape(bt, h_pad)

    # ---- causal Conv1d(H -> 2H, k) + GLU ------------------------------------------
    # Output-side realignment: y_j = x @ W_j on UNSHIFTED x, rolled down the flattened
    # time axis by s_j = k-1-j (XLU sublane rotate).  Rows with t < s_j (which would
    # otherwise read the causal pad rows / the previous sequence's tail) are overwritten
    # with the constant pad contribution.
    def conv_half(w_ref, pad_ref, b_ref):
        acc = None
        for j in range(k):
            y = jnp.dot(x_bf, w_ref[0, j], preferred_element_type=jnp.float32)
            s = k - 1 - j
            if s > 0:
                y = pltpu.roll(y, s, 0)
                y = jnp.where(t_idx < s, pad_ref[0, j], y)
            acc = y if acc is None else acc + y
        return acc + b_ref[0]

    a = conv_half(wca_ref, pada_ref, bca_ref)           # value half  [Bb*T, H_pad]  f32
    g = conv_half(wcg_ref, padg_ref, bcg_ref)           # gate  half  [Bb*T, H_pad]  f32
    conved = a * jax.nn.sigmoid(g)                      # GLU over channels (f32 VPU/EUP)

    # ---- attention ------------------------------------------------------------------
    conved_emb = (jnp.dot(conved.astype(jnp.bfloat16), wh2e_ref[...],
                          preferred_element_type=jnp.float32) + bh2e_ref[...])
    combined = ((conved_emb + tpe_flat) * SCALE).reshape(bb, t_len, e_pad)
    # energy = combined @ encoder_conved^T ; encc is pre-transposed to [Bb, E_pad, S_pad].
    energy = jax.lax.dot_general(
        combined.astype(jnp.bfloat16), encc_ref[...],
        dimension_numbers=(((2,), (1,)), ((0,), (0,))),
        preferred_element_type=jnp.float32)              # [Bb, T, S_pad]  f32
    src_valid = jax.lax.broadcasted_iota(jnp.int32, (1, 1, s_pad), 2) < src_len
    energy = jnp.where(src_valid, energy, -1e30)         # mask padded src lanes
    m = jnp.max(energy, axis=-1, keepdims=True)
    e = jnp.exp(energy - m)
    attn = e * pl.reciprocal(jnp.sum(e, axis=-1, keepdims=True), approx=False)
    # Output block is resident across the layer axis; HBM writeback happens once,
    # after the last layer, so this holds the final layer's attention.
    attn_ref[...] = attn

    attn_enc = jax.lax.dot_general(
        attn.astype(jnp.bfloat16), encz_ref[...],
        dimension_numbers=(((2,), (1,)), ((0,), (0,))),
        preferred_element_type=jnp.float32)               # [Bb, T, E_pad]  f32
    attn_enc_h = (jnp.dot(attn_enc.reshape(bt, e_pad).astype(jnp.bfloat16),
                          we2h_ref[...],
                          preferred_element_type=jnp.float32) + be2h_ref[...])

    # ---- residual ---------------------------------------------------------------------
    x_new = ((conved + attn_enc_h) * SCALE + x) * SCALE
    x_scr[...] = x_new

    # ---- hidden_to_embedding -> fc_out (last layer only) -------------------------------
    @pl.when(l == n_layers - 1)
    def _():
        conved_e = (jnp.dot(x_new.astype(jnp.bfloat16), wout_ref[...],
                            preferred_element_type=jnp.float32) + bout_ref[...])
        out = (jnp.dot(conved_e.astype(jnp.bfloat16), wfc_ref[...],
                       preferred_element_type=jnp.float32) + bfc_ref[...])
        out_ref[...] = out.reshape(bb, t_len, out_ref.shape[-1])


# ----------------------------------------------------------------------------
# Full decoder forward (single pallas_call)
# ----------------------------------------------------------------------------
def decoder_forward(trg, encoder_conved, encoder_combined, params, *,
                    kernel_size, trg_pad_idx):
    B, T = trg.shape
    E = params["tok_table"].shape[1]
    H = params["w_e2h_in"].shape[1]
    V = params["w_fc"].shape[1]
    S = encoder_conved.shape[1]
    L = len(params["convs"])
    k = kernel_size

    E_pad = _round_up(E, LANE)
    H_pad = _round_up(H, LANE)
    V_pad = _round_up(V, LANE)
    S_pad = _round_up(S, LANE)

    # Batch blocking: aggregate Bb sequences per grid step so the flattened MXU
    # M-dimension Bb*T reaches >=128 rows where the batch allows it.
    Bb = max(1, min(B, -(-LANE // T)))
    nb = -(-B // Bb)
    B_pad = nb * Bb
    # TODO(synk): on v7x (2 TCs/chip) keep nb even for megacore load balance at prod B.

    # ---- embedding lookups (gather) stay as plain JAX glue ---------------------------
    tok_emb = params["tok_table"][trg]                             # [B, T, E]
    pos_emb = params["pos_table"][jnp.arange(T)][None, :, :]       # [1, T, E]
    tpe = (tok_emb + pos_emb).astype(jnp.float32)
    # TODO(synk): nn.Dropout is treated as identity (eval mode).

    # ---- lane / batch padding (stripped again below) ---------------------------------
    tpe_p = jnp.pad(tpe, ((0, B_pad - B), (0, 0), (0, E_pad - E)))
    # encoder_conved pre-transposed to [B, E, S] -> energy matmul needs no in-kernel
    # transpose/relayout of the RHS.
    encc_t = jnp.pad(jnp.swapaxes(encoder_conved, 1, 2).astype(jnp.float32),
                     ((0, B_pad - B), (0, E_pad - E), (0, S_pad - S))
                     ).astype(jnp.bfloat16)
    encz_p = jnp.pad(encoder_combined.astype(jnp.float32),
                     ((0, B_pad - B), (0, S_pad - S), (0, E_pad - E))
                     ).astype(jnp.bfloat16)

    # ---- weights: lane-pad once; MXU operands bf16, biases f32 -----------------------
    w_in = _pad2(params["w_e2h_in"], E_pad, H_pad).astype(jnp.bfloat16)
    b_in = _pad2(params["b_e2h_in"], 1, H_pad).astype(jnp.float32)
    w_h2e = _pad2(params["w_att_h2e"], H_pad, E_pad).astype(jnp.bfloat16)
    b_h2e = _pad2(params["b_att_h2e"], 1, E_pad).astype(jnp.float32)
    w_e2h = _pad2(params["w_att_e2h"], E_pad, H_pad).astype(jnp.bfloat16)
    b_e2h = _pad2(params["b_att_e2h"], 1, H_pad).astype(jnp.float32)
    w_out = _pad2(params["w_h2e_out"], H_pad, E_pad).astype(jnp.bfloat16)
    b_out = _pad2(params["b_h2e_out"], 1, E_pad).astype(jnp.float32)
    w_fc = _pad2(params["w_fc"], E_pad, V_pad).astype(jnp.bfloat16)
    b_fc = _pad2(params["b_fc"], 1, V_pad).astype(jnp.float32)

    # Per-layer conv weights, pre-split into GLU value / gate halves.
    wconv = jnp.stack([w for (w, _) in params["convs"]]).astype(jnp.float32)  # [L,k,H,2H]
    bconv = jnp.stack([b for (_, b) in params["convs"]]).astype(jnp.float32)  # [L,1,2H]
    wca = jnp.pad(wconv[..., :H], ((0, 0), (0, 0), (0, H_pad - H), (0, H_pad - H)))
    wcg = jnp.pad(wconv[..., H:], ((0, 0), (0, 0), (0, H_pad - H), (0, H_pad - H)))
    bca = jnp.pad(bconv[..., :H], ((0, 0), (0, 0), (0, H_pad - H)))            # [L,1,H_pad]
    bcg = jnp.pad(bconv[..., H:], ((0, 0), (0, 0), (0, H_pad - H)))
    # Constant causal-pad contribution per tap: pad_val * colsum(W_j)   [L,k,1,H_pad].
    # (pad rows hold float(trg_pad_idx) in HIDDEN space — intentional PyTorch quirk.)
    pad_a = (float(trg_pad_idx) * jnp.sum(wca, axis=2))[:, :, None, :]
    pad_g = (float(trg_pad_idx) * jnp.sum(wcg, axis=2))[:, :, None, :]
    wca_bf = wca.astype(jnp.bfloat16)
    wcg_bf = wcg.astype(jnp.bfloat16)

    per_batch = lambda b, l: (b, 0, 0)
    per_layer4 = lambda b, l: (l, 0, 0, 0)
    per_layer3 = lambda b, l: (l, 0, 0)
    const2 = lambda b, l: (0, 0)

    in_specs = [
        pl.BlockSpec((Bb, T, E_pad), per_batch),                 # tpe
        pl.BlockSpec((Bb, E_pad, S_pad), per_batch),             # encoder_conved^T (bf16)
        pl.BlockSpec((Bb, S_pad, E_pad), per_batch),             # encoder_combined (bf16)
        _invariant_spec((E_pad, H_pad), const2),                 # embedding_to_hidden W
        _invariant_spec((1, H_pad), const2),                     # embedding_to_hidden b
        pl.BlockSpec((1, k, H_pad, H_pad), per_layer4),          # conv W value half (streamed)
        pl.BlockSpec((1, k, H_pad, H_pad), per_layer4),          # conv W gate  half (streamed)
        pl.BlockSpec((1, 1, H_pad), per_layer3),                 # conv b value half
        pl.BlockSpec((1, 1, H_pad), per_layer3),                 # conv b gate  half
        pl.BlockSpec((1, k, 1, H_pad), per_layer4),              # causal pad contrib (value)
        pl.BlockSpec((1, k, 1, H_pad), per_layer4),              # causal pad contrib (gate)
        _invariant_spec((H_pad, E_pad), const2),                 # attention_hidden2embed W
        _invariant_spec((1, E_pad), const2),                     # attention_hidden2embed b
        _invariant_spec((E_pad, H_pad), const2),                 # attention_embed2hidden W
        _invariant_spec((1, H_pad), const2),                     # attention_embed2hidden b
        _invariant_spec((H_pad, E_pad), const2),                 # hidden_to_embedding W
        _invariant_spec((1, E_pad), const2),                     # hidden_to_embedding b
        _invariant_spec((E_pad, V_pad), const2),                 # fc_out W (lane padded)
        _invariant_spec((1, V_pad), const2),                     # fc_out b (lane padded)
    ]
    out_specs = (pl.BlockSpec((Bb, T, V_pad), per_batch),
                 pl.BlockSpec((Bb, T, S_pad), per_batch))

    args = (tpe_p, encc_t, encz_p, w_in, b_in, wca_bf, wcg_bf, bca, bcg, pad_a, pad_g,
            w_h2e, b_h2e, w_e2h, b_e2h, w_out, b_out, w_fc, b_fc)

    # ---- advisory cost estimate -------------------------------------------------------
    bt = B_pad * T
    flops = 2 * bt * E_pad * H_pad
    flops += L * (2 * bt * k * H_pad * H_pad * 2        # conv taps, value+gate halves
                  + 2 * bt * H_pad * E_pad              # attention hidden2embed
                  + 2 * bt * E_pad * S_pad              # energy
                  + 2 * bt * S_pad * E_pad              # attn @ encoder_combined
                  + 2 * bt * E_pad * H_pad)             # attention embed2hidden
    flops += 2 * bt * H_pad * E_pad + 2 * bt * E_pad * V_pad
    transcendentals = L * bt * (S_pad + H_pad)          # softmax exp + GLU sigmoid
    bytes_accessed = int(sum(a.size * a.dtype.itemsize for a in args)
                         + bt * (V_pad + S_pad) * 4)
    cost = pl.CostEstimate(flops=int(flops), transcendentals=int(transcendentals),
                           bytes_accessed=bytes_accessed)

    # ---- explicit VMEM budget (v7x's 64 MiB is the tight case) -------------------------
    streamed = (Bb * T * E_pad * 4                                  # tpe block
                + Bb * E_pad * S_pad * 2 + Bb * S_pad * E_pad * 2   # encoder blocks (bf16)
                + 2 * k * H_pad * H_pad * 2 + 2 * k * H_pad * 4     # per-layer conv W + pad
                + 2 * H_pad * 4                                     # per-layer conv biases
                + Bb * T * (V_pad + S_pad) * 4)                     # output blocks
    invariant = ((E_pad * H_pad * 3 + H_pad * E_pad * 2 + E_pad * V_pad) * 2
                 + (3 * H_pad + 3 * E_pad + V_pad) * 4)
    scratch = Bb * T * H_pad * 4
    vmem_bytes = int(1.25 * (2 * streamed + invariant + scratch))
    vmem_bytes = min(48 * 1024 * 1024, max(16 * 1024 * 1024, vmem_bytes))

    kern = functools.partial(_decoder_layer_kernel, n_layers=L, kernel_size=k,
                             src_len=S, bb=Bb, t_len=T)

    out_pad, attn_pad = pl.pallas_call(
        kern,
        out_shape=(jax.ShapeDtypeStruct((B_pad, T, V_pad), jnp.float32),
                   jax.ShapeDtypeStruct((B_pad, T, S_pad), jnp.float32)),
        grid=(nb, L),
        in_specs=in_specs,
        out_specs=out_specs,
        scratch_shapes=[pltpu.VMEM((Bb * T, H_pad), jnp.float32)],   # residual stream carry
        compiler_params=pltpu.CompilerParams(
            dimension_semantics=("parallel", "arbitrary"),
            vmem_limit_bytes=vmem_bytes),
        cost_estimate=cost,
    )(*args)

    # Strip the lane / batch padding in the wrapper.
    return out_pad[:B, :, :V], attn_pad[:B, :, :S]


# ----------------------------------------------------------------------------
# Pure-JAX f32 reference (correctness sanity check)
# ----------------------------------------------------------------------------
def decoder_reference(trg, encc, encz, params, *, kernel_size, trg_pad_idx):
    B, T = trg.shape
    tpe = params["tok_table"][trg] + params["pos_table"][jnp.arange(T)][None]
    x = tpe @ params["w_e2h_in"] + params["b_e2h_in"]
    attn = None
    for (wconv, bconv) in params["convs"]:
        H = x.shape[-1]
        pad = jnp.full((B, kernel_size - 1, H), float(trg_pad_idx), jnp.float32)
        padded = jnp.concatenate([pad, x], axis=1)
        conv = jnp.zeros((B, T, 2 * H), jnp.float32) + bconv
        for j in range(kernel_size):
            conv = conv + jnp.einsum("bth,hf->btf", padded[:, j:j + T, :], wconv[j])
        conved = conv[..., :H] * jax.nn.sigmoid(conv[..., H:])
        conved_emb = conved @ params["w_att_h2e"] + params["b_att_h2e"]
        combined = (conved_emb + tpe) * SCALE
        energy = jnp.einsum("bte,bse->bts", combined, encc)
        attn = jax.nn.softmax(energy, axis=-1)
        attn_enc = jnp.einsum("bts,bse->bte", attn, encz)
        attn_enc_h = attn_enc @ params["w_att_e2h"] + params["b_att_e2h"]
        x = (((conved + attn_enc_h) * SCALE) + x) * SCALE
    conved = x @ params["w_h2e_out"] + params["b_h2e_out"]
    out = conved @ params["w_fc"] + params["b_fc"]
    return out, attn


# ----------------------------------------------------------------------------
if __name__ == "__main__":
    # Hyperparameters (mirror Decoder.__init__ arguments)
    output_dim = 20          # vocab size
    emb_dim = 32
    hidden_dim = 32
    n_layers = 2
    kernel_size = 3
    trg_pad_idx = 1
    position_length = 50

    B, T, S = 2, 8, 10       # batch, trg_len, src_len

    key = jax.random.PRNGKey(0)
    ks = jax.random.split(key, 16)

    def rnd(k, shape, scale=0.1):
        return scale * jax.random.normal(k, shape, jnp.float32)

    params = {
        "tok_table": rnd(ks[0], (output_dim, emb_dim)),
        "pos_table": rnd(ks[1], (position_length, emb_dim)),
        "w_e2h_in": rnd(ks[2], (emb_dim, hidden_dim)),
        "b_e2h_in": rnd(ks[3], (1, hidden_dim)),
        "w_h2e_out": rnd(ks[4], (hidden_dim, emb_dim)),
        "b_h2e_out": rnd(ks[5], (1, emb_dim)),
        "w_fc": rnd(ks[6], (emb_dim, output_dim)),
        "b_fc": rnd(ks[7], (1, output_dim)),
        # attention linears (shared across layers, like the PyTorch module)
        "w_att_h2e": rnd(ks[8], (hidden_dim, emb_dim)),
        "b_att_h2e": rnd(ks[9], (1, emb_dim)),
        "w_att_e2h": rnd(ks[10], (emb_dim, hidden_dim)),
        "b_att_e2h": rnd(ks[11], (1, hidden_dim)),
        # per-layer conv weights stored as [k, H, 2H] (== Conv1d weight[o,c,j] -> [j, c, o])
        "convs": [
            (rnd(jax.random.fold_in(ks[12], i), (kernel_size, hidden_dim, 2 * hidden_dim)),
             rnd(jax.random.fold_in(ks[13], i), (1, 2 * hidden_dim)))
            for i in range(n_layers)
        ],
    }

    trg = jax.random.randint(ks[14], (B, T), 0, output_dim)
    encoder_conved = rnd(ks[15], (B, S, emb_dim), scale=1.0)
    encoder_combined = rnd(jax.random.fold_in(ks[15], 1), (B, S, emb_dim), scale=1.0)

    out, attn = decoder_forward(trg, encoder_conved, encoder_combined, params,
                                kernel_size=kernel_size, trg_pad_idx=trg_pad_idx)
    out = jax.block_until_ready(out)
    attn = jax.block_until_ready(attn)

    # Sanity check against a pure-JAX f32 reference.  Tolerances are relaxed because the
    # kernel feeds the MXU bf16 operands (f32 accumulation / softmax), per the perf review.
    out_ref, attn_ref = decoder_reference(trg, encoder_conved, encoder_combined,
                                          params, kernel_size=kernel_size,
                                          trg_pad_idx=trg_pad_idx)
    assert out.shape == (B, T, output_dim)
    assert attn.shape == (B, T, S)
    assert jnp.allclose(out, out_ref, rtol=3e-2, atol=3e-2)
    assert jnp.allclose(attn, attn_ref, rtol=2e-2, atol=2e-2)

    print("KERNEL_OK")
</pallas_src>

<mosaic_0001>
module attributes {stable_mosaic.version = 11 : i64} {
  func.func @_decoder_layer_kernel(%arg0: i32, %arg1: i32, %arg2: memref<2x8x128xf32, #tpu.memory_space<vmem>>, %arg3: memref<2x128x128xbf16, #tpu.memory_space<vmem>>, %arg4: memref<2x128x128xbf16, #tpu.memory_space<vmem>>, %arg5: memref<128x128xbf16, #tpu.memory_space<vmem>>, %arg6: memref<1x128xf32, #tpu.memory_space<vmem>>, %arg7: memref<1x3x128x128xbf16, #tpu.memory_space<vmem>>, %arg8: memref<1x3x128x128xbf16, #tpu.memory_space<vmem>>, %arg9: memref<1x1x128xf32, #tpu.memory_space<vmem>>, %arg10: memref<1x1x128xf32, #tpu.memory_space<vmem>>, %arg11: memref<1x3x1x128xf32, #tpu.memory_space<vmem>>, %arg12: memref<1x3x1x128xf32, #tpu.memory_space<vmem>>, %arg13: memref<128x128xbf16, #tpu.memory_space<vmem>>, %arg14: memref<1x128xf32, #tpu.memory_space<vmem>>, %arg15: memref<128x128xbf16, #tpu.memory_space<vmem>>, %arg16: memref<1x128xf32, #tpu.memory_space<vmem>>, %arg17: memref<128x128xbf16, #tpu.memory_space<vmem>>, %arg18: memref<1x128xf32, #tpu.memory_space<vmem>>, %arg19: memref<128x128xbf16, #tpu.memory_space<vmem>>, %arg20: memref<1x128xf32, #tpu.memory_space<vmem>>, %arg21: memref<2x8x128xf32, #tpu.memory_space<vmem>>, %arg22: memref<2x8x128xf32, #tpu.memory_space<vmem>>, %arg23: memref<16x128xf32, #tpu.memory_space<vmem>>) attributes {dimension_semantics = [#tpu.dimension_semantics<parallel>, #tpu.dimension_semantics<arbitrary>], iteration_bounds = array<i64: 1, 2>, scalar_prefetch = 0 : i64, scratch_operands = 1 : i64, tpu.core_type = #tpu.core_type<tc>, window_params = [{transform_indices = @transform_0, window_bounds = array<i64: 2, 8, 128>}, {transform_indices = @transform_1, window_bounds = array<i64: 2, 128, 128>}, {transform_indices = @transform_2, window_bounds = array<i64: 2, 128, 128>}, {pipeline_mode = #tpu.pipeline_mode<synchronous>, transform_indices = @transform_3, window_bounds = array<i64: 128, 128>}, {pipeline_mode = #tpu.pipeline_mode<synchronous>, transform_indices = @transform_4, window_bounds = array<i64: 1, 128>}, {transform_indices = @transform_5, window_bounds = array<i64: 1, 3, 128, 128>}, {transform_indices = @transform_6, window_bounds = array<i64: 1, 3, 128, 128>}, {transform_indices = @transform_7, window_bounds = array<i64: 1, 1, 128>}, {transform_indices = @transform_8, window_bounds = array<i64: 1, 1, 128>}, {transform_indices = @transform_9, window_bounds = array<i64: 1, 3, 1, 128>}, {transform_indices = @transform_10, window_bounds = array<i64: 1, 3, 1, 128>}, {pipeline_mode = #tpu.pipeline_mode<synchronous>, transform_indices = @transform_11, window_bounds = array<i64: 128, 128>}, {pipeline_mode = #tpu.pipeline_mode<synchronous>, transform_indices = @transform_12, window_bounds = array<i64: 1, 128>}, {pipeline_mode = #tpu.pipeline_mode<synchronous>, transform_indices = @transform_13, window_bounds = array<i64: 128, 128>}, {pipeline_mode = #tpu.pipeline_mode<synchronous>, transform_indices = @transform_14, window_bounds = array<i64: 1, 128>}, {pipeline_mode = #tpu.pipeline_mode<synchronous>, transform_indices = @transform_15, window_bounds = array<i64: 128, 128>}, {pipeline_mode = #tpu.pipeline_mode<synchronous>, transform_indices = @transform_16, window_bounds = array<i64: 1, 128>}, {pipeline_mode = #tpu.pipeline_mode<synchronous>, transform_indices = @transform_17, window_bounds = array<i64: 128, 128>}, {pipeline_mode = #tpu.pipeline_mode<synchronous>, transform_indices = @transform_18, window_bounds = array<i64: 1, 128>}, {transform_indices = @transform_19, window_bounds = array<i64: 2, 8, 128>}, {transform_indices = @transform_20, window_bounds = array<i64: 2, 8, 128>}]} {
    %c0 = arith.constant 0 : index
    %c0_0 = arith.constant 0 : index
    %c0_1 = arith.constant 0 : index
    %0 = vector.load %arg2[%c0, %c0_0, %c0_1] : memref<2x8x128xf32, #tpu.memory_space<vmem>>, vector<2x8x128xf32>
    %1 = vector.shape_cast %0 : vector<2x8x128xf32> to vector<16x128xf32>
    %c0_i32 = arith.constant 0 : i32
    %2 = arith.cmpi eq, %arg1, %c0_i32 : i32
    %3 = arith.extui %2 : i1 to i32
    %c0_i32_2 = arith.constant 0 : i32
    %4 = arith.cmpi ne, %3, %c0_i32_2 : i32
    scf.if %4 {
      %128 = arith.truncf %1 : vector<16x128xf32> to vector<16x128xbf16>
      %c0_92 = arith.constant 0 : index
      %c0_93 = arith.constant 0 : index
      %129 = vector.load %arg5[%c0_92, %c0_93] : memref<128x128xbf16, #tpu.memory_space<vmem>>, vector<128x128xbf16>
      %cst_94 = arith.constant dense<0.000000e+00> : vector<16x128xf32>
      %130 = tpu.matmul %128, %129, %cst_94 {dimension_numbers = #tpu.dot_dimension_numbers<[1], [0], [0], [1], [0, 0, 1, 1], [], []>} : vector<16x128xbf16>, vector<128x128xbf16>, vector<16x128xf32> -> vector<16x128xf32>
      %c0_95 = arith.constant 0 : index
      %c0_96 = arith.constant 0 : index
      %131 = vector.load %arg6[%c0_95, %c0_96] : memref<1x128xf32, #tpu.memory_space<vmem>>, vector<1x128xf32>
      %132 = vector.broadcast %131 : vector<1x128xf32> to vector<16x128xf32>
      %133 = arith.addf %130, %132 : vector<16x128xf32>
      %c0_97 = arith.constant 0 : index
      %c0_98 = arith.constant 0 : index
      %134 = vector.load %arg23[%c0_97, %c0_98] : memref<16x128xf32, #tpu.memory_space<vmem>>, vector<16x128xf32>
      tpu.vector_store %arg23[%c0_97, %c0_98], %133 {strides = array<i32>} : memref<16x128xf32, #tpu.memory_space<vmem>>, vector<16x128xf32>,
    } else {
    }
    %c0_3 = arith.constant 0 : index
    %c0_4 = arith.constant 0 : index
    %5 = vector.load %arg23[%c0_3, %c0_4] : memref<16x128xf32, #tpu.memory_space<vmem>>, vector<16x128xf32>
    %6 = arith.truncf %5 : vector<16x128xf32> to vector<16x128xbf16>
    %7 = tpu.iota {dimensions = array<i32: 1>} : vector<2x8x128xi32>
    %8 = vector.shape_cast %7 : vector<2x8x128xi32> to vector<16x128xi32>
    %c0_5 = arith.constant 0 : index
    %c0_6 = arith.constant 0 : index
    %c0_7 = arith.constant 0 : index
    %c0_8 = arith.constant 0 : index
    %9 = vector.load %arg7[%c0_5, %c0_6, %c0_7, %c0_8] : memref<1x3x128x128xbf16, #tpu.memory_space<vmem>>, vector<1x1x128x128xbf16>
    %10 = vector.shape_cast %9 : vector<1x1x128x128xbf16> to vector<128x128xbf16>
    %cst = arith.constant dense<0.000000e+00> : vector<16x128xf32>
    %11 = tpu.matmul %6, %10, %cst {dimension_numbers = #tpu.dot_dimension_numbers<[1], [0], [0], [1], [0, 0, 1, 1], [], []>} : vector<16x128xbf16>, vector<128x128xbf16>, vector<16x128xf32> -> vector<16x128xf32>
    %c2_i32 = arith.constant 2 : i32
    %12 = tpu.dynamic_rotate %11 by %c2_i32 dim 0 : vector<16x128xf32>, i32 -> vector<16x128xf32>
    %c2_i32_9 = arith.constant 2 : i32
    %13 = vector.broadcast %c2_i32_9 : i32 to vector<16x128xi32>
    %14 = arith.cmpi slt, %8, %13 : vector<16x128xi32>
    %c0_10 = arith.constant 0 : index
    %c0_11 = arith.constant 0 : index
    %c0_12 = arith.constant 0 : index
    %c0_13 = arith.constant 0 : index
    %15 = vector.load %arg11[%c0_10, %c0_11, %c0_12, %c0_13] : memref<1x3x1x128xf32, #tpu.memory_space<vmem>>, vector<1x1x1x128xf32>
    %16 = vector.shape_cast %15 : vector<1x1x1x128xf32> to vector<1x128xf32>
    %17 = vector.shape_cast %16 : vector<1x128xf32> to vector<1x128xf32>
    %18 = vector.broadcast %17 : vector<1x128xf32> to vector<16x128xf32>
    %19 = arith.select %14, %18, %12 : vector<16x128xi1>, vector<16x128xf32>
    %c0_14 = arith.constant 0 : index
    %c1 = arith.constant 1 : index
    %c0_15 = arith.constant 0 : index
    %c0_16 = arith.constant 0 : index
    %20 = vector.load %arg7[%c0_14, %c1, %c0_15, %c0_16] : memref<1x3x128x128xbf16, #tpu.memory_space<vmem>>, vector<1x1x128x128xbf16>
    %21 = vector.shape_cast %20 : vector<1x1x128x128xbf16> to vector<128x128xbf16>
    %cst_17 = arith.constant dense<0.000000e+00> : vector<16x128xf32>
    %22 = tpu.matmul %6, %21, %cst_17 {dimension_numbers = #tpu.dot_dimension_numbers<[1], [0], [0], [1], [0, 0, 1, 1], [], []>} : vector<16x128xbf16>, vector<128x128xbf16>, vector<16x128xf32> -> vector<16x128xf32>
    %c1_i32 = arith.constant 1 : i32
    %23 = tpu.dynamic_rotate %22 by %c1_i32 dim 0 : vector<16x128xf32>, i32 -> vector<16x128xf32>
    %c1_i32_18 = arith.constant 1 : i32
    %24 = vector.broadcast %c1_i32_18 : i32 to vector<16x128xi32>
    %25 = arith.cmpi slt, %8, %24 : vector<16x128xi32>
    %c0_19 = arith.constant 0 : index
    %c1_20 = arith.constant 1 : index
    %c0_21 = arith.constant 0 : index
    %c0_22 = arith.constant 0 : index
    %26 = vector.load %arg11[%c0_19, %c1_20, %c0_21, %c0_22] : memref<1x3x1x128xf32, #tpu.memory_space<vmem>>, vector<1x1x1x128xf32>
    %27 = vector.shape_cast %26 : vector<1x1x1x128xf32> to vector<1x128xf32>
    %28 = vector.shape_cast %27 : vector<1x128xf32> to vector<1x128xf32>
    %29 = vector.broadcast %28 : vector<1x128xf32> to vector<16x128xf32>
    %30 = arith.select %25, %29, %23 : vector<16x128xi1>, vector<16x128xf32>
    %31 = arith.addf %19, %30 : vector<16x128xf32>
    %c0_23 = arith.constant 0 : index
    %c2 = arith.constant 2 : index
    %c0_24 = arith.constant 0 : index
    %c0_25 = arith.constant 0 : index
    %32 = vector.load %arg7[%c0_23, %c2, %c0_24, %c0_25] : memref<1x3x128x128xbf16, #tpu.memory_space<vmem>>, vector<1x1x128x128xbf16>
    %33 = vector.shape_cast %32 : vector<1x1x128x128xbf16> to vector<128x128xbf16>
    %cst_26 = arith.constant dense<0.000000e+00> : vector<16x128xf32>
    %34 = tpu.matmul %6, %33, %cst_26 {dimension_numbers = #tpu.dot_dimension_numbers<[1], [0], [0], [1], [0, 0, 1, 1], [], []>} : vector<16x128xbf16>, vector<128x128xbf16>, vector<16x128xf32> -> vector<16x128xf32>
    %35 = arith.addf %31, %34 : vector<16x128xf32>
    %c0_27 = arith.constant 0 : index
    %c0_28 = arith.constant 0 : index
    %c0_29 = arith.constant 0 : index
    %36 = vector.load %arg9[%c0_27, %c0_28, %c0_29] : memref<1x1x128xf32, #tpu.memory_space<vmem>>, vector<1x1x128xf32>
    %37 = vector.shape_cast %36 : vector<1x1x128xf32> to vector<1x128xf32>
    %38 = vector.broadcast %37 : vector<1x128xf32> to vector<16x128xf32>
    %39 = arith.addf %35, %38 : vector<16x128xf32>
    %c0_30 = arith.constant 0 : index
    %c0_31 = arith.constant 0 : index
    %c0_32 = arith.constant 0 : index
    %c0_33 = arith.constant 0 : index
    %40 = vector.load %arg8[%c0_30, %c0_31, %c0_32, %c0_33] : memref<1x3x128x128xbf16, #tpu.memory_space<vmem>>, vector<1x1x128x128xbf16>
    %41 = vector.shape_cast %40 : vector<1x1x128x128xbf16> to vector<128x128xbf16>
    %cst_34 = arith.constant dense<0.000000e+00> : vector<16x128xf32>
    %42 = tpu.matmul %6, %41, %cst_34 {dimension_numbers = #tpu.dot_dimension_numbers<[1], [0], [0], [1], [0, 0, 1, 1], [], []>} : vector<16x128xbf16>, vector<128x128xbf16>, vector<16x128xf32> -> vector<16x128xf32>
    %c2_i32_35 = arith.constant 2 : i32
    %43 = tpu.dynamic_rotate %42 by %c2_i32_35 dim 0 : vector<16x128xf32>, i32 -> vector<16x128xf32>
    %c2_i32_36 = arith.constant 2 : i32
    %44 = vector.broadcast %c2_i32_36 : i32 to vector<16x128xi32>
    %45 = arith.cmpi slt, %8, %44 : vector<16x128xi32>
    %c0_37 = arith.constant 0 : index
    %c0_38 = arith.constant 0 : index
    %c0_39 = arith.constant 0 : index
    %c0_40 = arith.constant 0 : index
    %46 = vector.load %arg12[%c0_37, %c0_38, %c0_39, %c0_40] : memref<1x3x1x128xf32, #tpu.memory_space<vmem>>, vector<1x1x1x128xf32>
    %47 = vector.shape_cast %46 : vector<1x1x1x128xf32> to vector<1x128xf32>
    %48 = vector.shape_cast %47 : vector<1x128xf32> to vector<1x128xf32>
    %49 = vector.broadcast %48 : vector<1x128xf32> to vector<16x128xf32>
    %50 = arith.select %45, %49, %43 : vector<16x128xi1>, vector<16x128xf32>
    %c0_41 = arith.constant 0 : index
    %c1_42 = arith.constant 1 : index
    %c0_43 = arith.constant 0 : index
    %c0_44 = arith.constant 0 : index
    %51 = vector.load %arg8[%c0_41, %c1_42, %c0_43, %c0_44] : memref<1x3x128x128xbf16, #tpu.memory_space<vmem>>, vector<1x1x128x128xbf16>
    %52 = vector.shape_cast %51 : vector<1x1x128x128xbf16> to vector<128x128xbf16>
    %cst_45 = arith.constant dense<0.000000e+00> : vector<16x128xf32>
    %53 = tpu.matmul %6, %52, %cst_45 {dimension_numbers = #tpu.dot_dimension_numbers<[1], [0], [0], [1], [0, 0, 1, 1], [], []>} : vector<16x128xbf16>, vector<128x128xbf16>, vector<16x128xf32> -> vector<16x128xf32>
    %c1_i32_46 = arith.constant 1 : i32
    %54 = tpu.dynamic_rotate %53 by %c1_i32_46 dim 0 : vector<16x128xf32>, i32 -> vector<16x128xf32>
    %c1_i32_47 = arith.constant 1 : i32
    %55 = vector.broadcast %c1_i32_47 : i32 to vector<16x128xi32>
    %56 = arith.cmpi slt, %8, %55 : vector<16x128xi32>
    %c0_48 = arith.constant 0 : index
    %c1_49 = arith.constant 1 : index
    %c0_50 = arith.constant 0 : index
    %c0_51 = arith.constant 0 : index
    %57 = vector.load %arg12[%c0_48, %c1_49, %c0_50, %c0_51] : memref<1x3x1x128xf32, #tpu.memory_space<vmem>>, vector<1x1x1x128xf32>
    %58 = vector.shape_cast %57 : vector<1x1x1x128xf32> to vector<1x128xf32>
    %59 = vector.shape_cast %58 : vector<1x128xf32> to vector<1x128xf32>
    %60 = vector.broadcast %59 : vector<1x128xf32> to vector<16x128xf32>
    %61 = arith.select %56, %60, %54 : vector<16x128xi1>, vector<16x128xf32>
    %62 = arith.addf %50, %61 : vector<16x128xf32>
    %c0_52 = arith.constant 0 : index
    %c2_53 = arith.constant 2 : index
    %c0_54 = arith.constant 0 : index
    %c0_55 = arith.constant 0 : index
    %63 = vector.load %arg8[%c0_52, %c2_53, %c0_54, %c0_55] : memref<1x3x128x128xbf16, #tpu.memory_space<vmem>>, vector<1x1x128x128xbf16>
    %64 = vector.shape_cast %63 : vector<1x1x128x128xbf16> to vector<128x128xbf16>
    %cst_56 = arith.constant dense<0.000000e+00> : vector<16x128xf32>
    %65 = tpu.matmul %6, %64, %cst_56 {dimension_numbers = #tpu.dot_dimension_numbers<[1], [0], [0], [1], [0, 0, 1, 1], [], []>} : vector<16x128xbf16>, vector<128x128xbf16>, vector<16x128xf32> -> vector<16x128xf32>
    %66 = arith.addf %62, %65 : vector<16x128xf32>
    %c0_57 = arith.constant 0 : index
    %c0_58 = arith.constant 0 : index
    %c0_59 = arith.constant 0 : index
    %67 = vector.load %arg10[%c0_57, %c0_58, %c0_59] : memref<1x1x128xf32, #tpu.memory_space<vmem>>, vector<1x1x128xf32>
    %68 = vector.shape_cast %67 : vector<1x1x128xf32> to vector<1x128xf32>
    %69 = vector.broadcast %68 : vector<1x128xf32> to vector<16x128xf32>
    %70 = arith.addf %66, %69 : vector<16x128xf32>
    %71 = arith.negf %70 : vector<16x128xf32>
    %72 = math.exp %71 : vector<16x128xf32>
    %cst_60 = arith.constant 1.000000e+00 : f32
    %73 = vector.broadcast %cst_60 : f32 to vector<16x128xf32>
    %74 = arith.addf %73, %72 : vector<16x128xf32>
    %75 = arith.divf %73, %74 : vector<16x128xf32>
    %76 = arith.mulf %39, %75 : vector<16x128xf32>
    %77 = arith.truncf %76 : vector<16x128xf32> to vector<16x128xbf16>
    %c0_61 = arith.constant 0 : index
    %c0_62 = arith.constant 0 : index
    %78 = vector.load %arg13[%c0_61, %c0_62] : memref<128x128xbf16, #tpu.memory_space<vmem>>, vector<128x128xbf16>
    %cst_63 = arith.constant dense<0.000000e+00> : vector<16x128xf32>
    %79 = tpu.matmul %77, %78, %cst_63 {dimension_numbers = #tpu.dot_dimension_numbers<[1], [0], [0], [1], [0, 0, 1, 1], [], []>} : vector<16x128xbf16>, vector<128x128xbf16>, vector<16x128xf32> -> vector<16x128xf32>
    %c0_64 = arith.constant 0 : index
    %c0_65 = arith.constant 0 : index
    %80 = vector.load %arg14[%c0_64, %c0_65] : memref<1x128xf32, #tpu.memory_space<vmem>>, vector<1x128xf32>
    %81 = vector.broadcast %80 : vector<1x128xf32> to vector<16x128xf32>
    %82 = arith.addf %79, %81 : vector<16x128xf32>
    %83 = arith.addf %82, %1 : vector<16x128xf32>
    %cst_66 = arith.constant 0.707106769 : f32
    %84 = vector.broadcast %cst_66 : f32 to vector<16x128xf32>
    %85 = arith.mulf %83, %84 : vector<16x128xf32>
    %86 = vector.shape_cast %85 : vector<16x128xf32> to vector<2x8x128xf32>
    %87 = arith.truncf %86 : vector<2x8x128xf32> to vector<2x8x128xbf16>
    %c0_67 = arith.constant 0 : index
    %c0_68 = arith.constant 0 : index
    %c0_69 = arith.constant 0 : index
    %88 = vector.load %arg3[%c0_67, %c0_68, %c0_69] : memref<2x128x128xbf16, #tpu.memory_space<vmem>>, vector<2x128x128xbf16>
    %cst_70 = arith.constant dense<0.000000e+00> : vector<2x8x128xf32>
    %89 = tpu.matmul %87, %88, %cst_70 {dimension_numbers = #tpu.dot_dimension_numbers<[2], [1], [1], [2], [0, 0, 0, 1, 1, 2], [0], [0]>} : vector<2x8x128xbf16>, vector<2x128x128xbf16>, vector<2x8x128xf32> -> vector<2x8x128xf32>
    %90 = tpu.iota {dimensions = array<i32: 2>} : vector<1x1x128xi32>
    %c10_i32 = arith.constant 10 : i32
    %91 = vector.broadcast %c10_i32 : i32 to vector<1x1x128xi32>
    %92 = arith.cmpi slt, %90, %91 : vector<1x1x128xi32>
    %cst_71 = arith.constant -1.000000e+30 : f32
    %93 = vector.shape_cast %92 : vector<1x1x128xi1> to vector<1x1x128xi1>
    %94 = vector.broadcast %93 : vector<1x1x128xi1> to vector<2x8x128xi1>
    %95 = vector.broadcast %cst_71 : f32 to vector<2x8x128xf32>
    %96 = arith.select %94, %89, %95 : vector<2x8x128xi1>, vector<2x8x128xf32>
    %cst_72 = arith.constant dense<0xFF800000> : vector<2x8xf32>
    %97 = vector.multi_reduction <maximumf>, %96, %cst_72 [2] : vector<2x8x128xf32> to vector<2x8xf32>
    %98 = vector.shape_cast %97 : vector<2x8xf32> to vector<2x8x1xf32>
    %99 = vector.broadcast %98 : vector<2x8x1xf32> to vector<2x8x128xf32>
    %100 = arith.subf %96, %99 : vector<2x8x128xf32>
    %101 = math.exp %100 : vector<2x8x128xf32>
    %cst_73 = arith.constant dense<0.000000e+00> : vector<2x8xf32>
    %102 = vector.multi_reduction <add>, %101, %cst_73 [2] : vector<2x8x128xf32> to vector<2x8xf32>
    %103 = vector.shape_cast %102 : vector<2x8xf32> to vector<2x8x1xf32>
    %104 = tpu.reciprocal %103 : vector<2x8x1xf32> -> vector<2x8x1xf32>
    %105 = vector.broadcast %104 : vector<2x8x1xf32> to vector<2x8x128xf32>
    %106 = arith.mulf %101, %105 : vector<2x8x128xf32>
    %c0_74 = arith.constant 0 : index
    %c0_75 = arith.constant 0 : index
    %c0_76 = arith.constant 0 : index
    %107 = vector.load %arg22[%c0_74, %c0_75, %c0_76] : memref<2x8x128xf32, #tpu.memory_space<vmem>>, vector<2x8x128xf32>
    tpu.vector_store %arg22[%c0_74, %c0_75, %c0_76], %106 {strides = array<i32>} : memref<2x8x128xf32, #tpu.memory_space<vmem>>, vector<2x8x128xf32>,
    %108 = arith.truncf %106 : vector<2x8x128xf32> to vector<2x8x128xbf16>
    %c0_77 = arith.constant 0 : index
    %c0_78 = arith.constant 0 : index
    %c0_79 = arith.constant 0 : index
    %109 = vector.load %arg4[%c0_77, %c0_78, %c0_79] : memref<2x128x128xbf16, #tpu.memory_space<vmem>>, vector<2x128x128xbf16>
    %cst_80 = arith.constant dense<0.000000e+00> : vector<2x8x128xf32>
    %110 = tpu.matmul %108, %109, %cst_80 {dimension_numbers = #tpu.dot_dimension_numbers<[2], [1], [1], [2], [0, 0, 0, 1, 1, 2], [0], [0]>} : vector<2x8x128xbf16>, vector<2x128x128xbf16>, vector<2x8x128xf32> -> vector<2x8x128xf32>
    %111 = vector.shape_cast %110 : vector<2x8x128xf32> to vector<16x128xf32>
    %112 = arith.truncf %111 : vector<16x128xf32> to vector<16x128xbf16>
    %c0_81 = arith.constant 0 : index
    %c0_82 = arith.constant 0 : index
    %113 = vector.load %arg15[%c0_81, %c0_82] : memref<128x128xbf16, #tpu.memory_space<vmem>>, vector<128x128xbf16>
    %cst_83 = arith.constant dense<0.000000e+00> : vector<16x128xf32>
    %114 = tpu.matmul %112, %113, %cst_83 {dimension_numbers = #tpu.dot_dimension_numbers<[1], [0], [0], [1], [0, 0, 1, 1], [], []>} : vector<16x128xbf16>, vector<128x128xbf16>, vector<16x128xf32> -> vector<16x128xf32>
    %c0_84 = arith.constant 0 : index
    %c0_85 = arith.constant 0 : index
    %115 = vector.load %arg16[%c0_84, %c0_85] : memref<1x128xf32, #tpu.memory_space<vmem>>, vector<1x128xf32>
    %116 = vector.broadcast %115 : vector<1x128xf32> to vector<16x128xf32>
    %117 = arith.addf %114, %116 : vector<16x128xf32>
    %118 = arith.addf %76, %117 : vector<16x128xf32>
    %cst_86 = arith.constant 0.707106769 : f32
    %119 = vector.broadcast %cst_86 : f32 to vector<16x128xf32>
    %120 = arith.mulf %118, %119 : vector<16x128xf32>
    %121 = arith.addf %120, %5 : vector<16x128xf32>
    %cst_87 = arith.constant 0.707106769 : f32
    %122 = vector.broadcast %cst_87 : f32 to vector<16x128xf32>
    %123 = arith.mulf %121, %122 : vector<16x128xf32>
    %c0_88 = arith.constant 0 : index
    %c0_89 = arith.constant 0 : index
    %124 = vector.load %arg23[%c0_88, %c0_89] : memref<16x128xf32, #tpu.memory_space<vmem>>, vector<16x128xf32>
    tpu.vector_store %arg23[%c0_88, %c0_89], %123 {strides = array<i32>} : memref<16x128xf32, #tpu.memory_space<vmem>>, vector<16x128xf32>,
    %c1_i32_90 = arith.constant 1 : i32
    %125 = arith.cmpi eq, %arg1, %c1_i32_90 : i32
    %126 = arith.extui %125 : i1 to i32
    %c0_i32_91 = arith.constant 0 : i32
    %127 = arith.cmpi ne, %126, %c0_i32_91 : i32
    scf.if %127 {
      %128 = arith.truncf %123 : vector<16x128xf32> to vector<16x128xbf16>
      %c0_92 = arith.constant 0 : index
      %c0_93 = arith.constant 0 : index
      %129 = vector.load %arg17[%c0_92, %c0_93] : memref<128x128xbf16, #tpu.memory_space<vmem>>, vector<128x128xbf16>
      %cst_94 = arith.constant dense<0.000000e+00> : vector<16x128xf32>
      %130 = tpu.matmul %128, %129, %cst_94 {dimension_numbers = #tpu.dot_dimension_numbers<[1], [0], [0], [1], [0, 0, 1, 1], [], []>} : vector<16x128xbf16>, vector<128x128xbf16>, vector<16x128xf32> -> vector<16x128xf32>
      %c0_95 = arith.constant 0 : index
      %c0_96 = arith.constant 0 : index
      %131 = vector.load %arg18[%c0_95, %c0_96] : memref<1x128xf32, #tpu.memory_space<vmem>>, vector<1x128xf32>
      %132 = vector.broadcast %131 : vector<1x128xf32> to vector<16x128xf32>
      %133 = arith.addf %130, %132 : vector<16x128xf32>
      %134 = arith.truncf %133 : vector<16x128xf32> to vector<16x128xbf16>
      %c0_97 = arith.constant 0 : index
      %c0_98 = arith.constant 0 : index
      %135 = vector.load %arg19[%c0_97, %c0_98] : memref<128x128xbf16, #tpu.memory_space<vmem>>, vector<128x128xbf16>
      %cst_99 = arith.constant dense<0.000000e+00> : vector<16x128xf32>
      %136 = tpu.matmul %134, %135, %cst_99 {dimension_numbers = #tpu.dot_dimension_numbers<[1], [0], [0], [1], [0, 0, 1, 1], [], []>} : vector<16x128xbf16>, vector<128x128xbf16>, vector<16x128xf32> -> vector<16x128xf32>
      %c0_100 = arith.constant 0 : index
      %c0_101 = arith.constant 0 : index
      %137 = vector.load %arg20[%c0_100, %c0_101] : memref<1x128xf32, #tpu.memory_space<vmem>>, vector<1x128xf32>
      %138 = vector.broadcast %137 : vector<1x128xf32> to vector<16x128xf32>
      %139 = arith.addf %136, %138 : vector<16x128xf32>
      %140 = vector.shape_cast %139 : vector<16x128xf32> to vector<2x8x128xf32>
      %c0_102 = arith.constant 0 : index
      %c0_103 = arith.constant 0 : index
      %c0_104 = arith.constant 0 : index
      %141 = vector.load %arg21[%c0_102, %c0_103, %c0_104] : memref<2x8x128xf32, #tpu.memory_space<vmem>>, vector<2x8x128xf32>
      tpu.vector_store %arg21[%c0_102, %c0_103, %c0_104], %140 {strides = array<i32>} : memref<2x8x128xf32, #tpu.memory_space<vmem>>, vector<2x8x128xf32>,
    } else {
    }
    return
  }
  func.func @transform_0(%arg0: i32, %arg1: i32) -> (i32, i32, i32) {
    %c0_i32 = arith.constant 0 : i32
    %c0_i32_0 = arith.constant 0 : i32
    %c0_i32_1 = arith.constant 0 : i32
    return %arg0, %c0_i32, %c0_i32_0 : i32, i32, i32
  }
  func.func @transform_1(%arg0: i32, %arg1: i32) -> (i32, i32, i32) {
    %c0_i32 = arith.constant 0 : i32
    %c0_i32_0 = arith.constant 0 : i32
    %c0_i32_1 = arith.constant 0 : i32
    return %arg0, %c0_i32, %c0_i32_0 : i32, i32, i32
  }
  func.func @transform_2(%arg0: i32, %arg1: i32) -> (i32, i32, i32) {
    %c0_i32 = arith.constant 0 : i32
    %c0_i32_0 = arith.constant 0 : i32
    %c0_i32_1 = arith.constant 0 : i32
    return %arg0, %c0_i32, %c0_i32_0 : i32, i32, i32
  }
  func.func @transform_3(%arg0: i32, %arg1: i32) -> (i32, i32) {
    %c0_i32 = arith.constant 0 : i32
    %c0_i32_0 = arith.constant 0 : i32
    %c0_i32_1 = arith.constant 0 : i32
    return %c0_i32, %c0_i32_0 : i32, i32
  }
  func.func @transform_4(%arg0: i32, %arg1: i32) -> (i32, i32) {
    %c0_i32 = arith.constant 0 : i32
    %c0_i32_0 = arith.constant 0 : i32
    %c0_i32_1 = arith.constant 0 : i32
    return %c0_i32, %c0_i32_0 : i32, i32
  }
  func.func @transform_5(%arg0: i32, %arg1: i32) -> (i32, i32, i32, i32) {
    %c0_i32 = arith.constant 0 : i32
    %c0_i32_0 = arith.constant 0 : i32
    %c0_i32_1 = arith.constant 0 : i32
    %c0_i32_2 = arith.constant 0 : i32
    return %arg1, %c0_i32, %c0_i32_0, %c0_i32_1 : i32, i32, i32, i32
  }
  func.func @transform_6(%arg0: i32, %arg1: i32) -> (i32, i32, i32, i32) {
    %c0_i32 = arith.constant 0 : i32
    %c0_i32_0 = arith.constant 0 : i32
    %c0_i32_1 = arith.constant 0 : i32
    %c0_i32_2 = arith.constant 0 : i32
    return %arg1, %c0_i32, %c0_i32_0, %c0_i32_1 : i32, i32, i32, i32
  }
  func.func @transform_7(%arg0: i32, %arg1: i32) -> (i32, i32, i32) {
    %c0_i32 = arith.constant 0 : i32
    %c0_i32_0 = arith.constant 0 : i32
    %c0_i32_1 = arith.constant 0 : i32
    return %arg1, %c0_i32, %c0_i32_0 : i32, i32, i32
  }
  func.func @transform_8(%arg0: i32, %arg1: i32) -> (i32, i32, i32) {
    %c0_i32 = arith.constant 0 : i32
    %c0_i32_0 = arith.constant 0 : i32
    %c0_i32_1 = arith.constant 0 : i32
    return %arg1, %c0_i32, %c0_i32_0 : i32, i32, i32
  }
  func.func @transform_9(%arg0: i32, %arg1: i32) -> (i32, i32, i32, i32) {
    %c0_i32 = arith.constant 0 : i32
    %c0_i32_0 = arith.constant 0 : i32
    %c0_i32_1 = arith.constant 0 : i32
    %c0_i32_2 = arith.constant 0 : i32
    return %arg1, %c0_i32, %c0_i32_0, %c0_i32_1 : i32, i32, i32, i32
  }
  func.func @transform_10(%arg0: i32, %arg1: i32) -> (i32, i32, i32, i32) {
    %c0_i32 = arith.constant 0 : i32
    %c0_i32_0 = arith.constant 0 : i32
    %c0_i32_1 = arith.constant 0 : i32
    %c0_i32_2 = arith.constant 0 : i32
    return %arg1, %c0_i32, %c0_i32_0, %c0_i32_1 : i32, i32, i32, i32
  }
  func.func @transform_11(%arg0: i32, %arg1: i32) -> (i32, i32) {
    %c0_i32 = arith.constant 0 : i32
    %c0_i32_0 = arith.constant 0 : i32
    %c0_i32_1 = arith.constant 0 : i32
    return %c0_i32, %c0_i32_0 : i32, i32
  }
  func.func @transform_12(%arg0: i32, %arg1: i32) -> (i32, i32) {
    %c0_i32 = arith.constant 0 : i32
    %c0_i32_0 = arith.constant 0 : i32
    %c0_i32_1 = arith.constant 0 : i32
    return %c0_i32, %c0_i32_0 : i32, i32
  }
  func.func @transform_13(%arg0: i32, %arg1: i32) -> (i32, i32) {
    %c0_i32 = arith.constant 0 : i32
    %c0_i32_0 = arith.constant 0 : i32
    %c0_i32_1 = arith.constant 0 : i32
    return %c0_i32, %c0_i32_0 : i32, i32
  }
  func.func @transform_14(%arg0: i32, %arg1: i32) -> (i32, i32) {
    %c0_i32 = arith.constant 0 : i32
    %c0_i32_0 = arith.constant 0 : i32
    %c0_i32_1 = arith.constant 0 : i32
    return %c0_i32, %c0_i32_0 : i32, i32
  }
  func.func @transform_15(%arg0: i32, %arg1: i32) -> (i32, i32) {
    %c0_i32 = arith.constant 0 : i32
    %c0_i32_0 = arith.constant 0 : i32
    %c0_i32_1 = arith.constant 0 : i32
    return %c0_i32, %c0_i32_0 : i32, i32
  }
  func.func @transform_16(%arg0: i32, %arg1: i32) -> (i32, i32) {
    %c0_i32 = arith.constant 0 : i32
    %c0_i32_0 = arith.constant 0 : i32
    %c0_i32_1 = arith.constant 0 : i32
    return %c0_i32, %c0_i32_0 : i32, i32
  }
  func.func @transform_17(%arg0: i32, %arg1: i32) -> (i32, i32) {
    %c0_i32 = arith.constant 0 : i32
    %c0_i32_0 = arith.constant 0 : i32
    %c0_i32_1 = arith.constant 0 : i32
    return %c0_i32, %c0_i32_0 : i32, i32
  }
  func.func @transform_18(%arg0: i32, %arg1: i32) -> (i32, i32) {
    %c0_i32 = arith.constant 0 : i32
    %c0_i32_0 = arith.constant 0 : i32
    %c0_i32_1 = arith.constant 0 : i32
    return %c0_i32, %c0_i32_0 : i32, i32
  }
  func.func @transform_19(%arg0: i32, %arg1: i32) -> (i32, i32, i32) {
    %c0_i32 = arith.constant 0 : i32
    %c0_i32_0 = arith.constant 0 : i32
    %c0_i32_1 = arith.constant 0 : i32
    return %arg0, %c0_i32, %c0_i32_0 : i32, i32, i32
  }
  func.func @transform_20(%arg0: i32, %arg1: i32) -> (i32, i32, i32) {
    %c0_i32 = arith.constant 0 : i32
    %c0_i32_0 = arith.constant 0 : i32
    %c0_i32_1 = arith.constant 0 : i32
    return %arg0, %c0_i32, %c0_i32_0 : i32, i32, i32
  }
}

</mosaic_0001>

<llo_original>
// kernel: tpu_custom_call.1
$region0: #{tpu_custom_call.1}
  #allocation0 [shape = 'u32[]', space=smem, size = 0x4, offset = 0x4, fixed_abs, tag = 'smem constant byte address 0x4 - core index']
  #allocation1 [shape = 'u32[72,128]{1,0:T(1,128)}', space=vmem, size = 0x9000, scoped, tag = 'internal scratch']
  #allocation2 [shape = 'f32[16,128]{1,0:T(8,128)}', space=vmem, size = 0x2000, scoped, tag = 'scratch operand']
  %s0 = inlined_call_operand.hbm [shape: f32[2,8,128], index: 0, kind: input, shape index: {}]
  %s1 = inlined_call_operand.hbm [shape: bf16[2,128,128], index: 1, kind: input, shape index: {}]
  %s2 = inlined_call_operand.hbm [shape: bf16[2,128,128], index: 2, kind: input, shape index: {}]
  %s3 = inlined_call_operand.hbm [shape: bf16[128,128], index: 3, kind: input, shape index: {}]
  %s4 = inlined_call_operand.hbm [shape: f32[1,128], index: 4, kind: input, shape index: {}]
  %s5 = inlined_call_operand.hbm [shape: bf16[2,3,128,128], index: 5, kind: input, shape index: {}]
  %s6 = inlined_call_operand.hbm [shape: bf16[2,3,128,128], index: 6, kind: input, shape index: {}]
  %s7 = inlined_call_operand.vmem [shape: f32[2,1,128], index: 7, kind: input, shape index: {}]
  %s8 = inlined_call_operand.hbm [shape: f32[2,1,128], index: 8, kind: input, shape index: {}]
  %s9 = inlined_call_operand.vmem [shape: f32[2,3,1,128], index: 9, kind: input, shape index: {}]
  %s10 = inlined_call_operand.hbm [shape: f32[2,3,1,128], index: 10, kind: input, shape index: {}]
  %s11 = inlined_call_operand.hbm [shape: bf16[128,128], index: 11, kind: input, shape index: {}]
  %s12 = inlined_call_operand.vmem [shape: f32[1,128], index: 12, kind: input, shape index: {}]
  %s13 = inlined_call_operand.hbm [shape: bf16[128,128], index: 13, kind: input, shape index: {}]
  %s14 = inlined_call_operand.vmem [shape: f32[1,128], index: 14, kind: input, shape index: {}]
  %s15 = inlined_call_operand.hbm [shape: bf16[128,128], index: 15, kind: input, shape index: {}]
  %s16 = inlined_call_operand.vmem [shape: f32[1,128], index: 16, kind: input, shape index: {}]
  %s17 = inlined_call_operand.hbm [shape: bf16[128,128], index: 17, kind: input, shape index: {}]
  %s18 = inlined_call_operand.vmem [shape: f32[1,128], index: 18, kind: input, shape index: {}]
  %s19 = inlined_call_operand.hbm [shape: f32[2,8,128], index: 19, kind: output, shape index: {0}]
  %s20 = inlined_call_operand.hbm [shape: f32[2,8,128], index: 20, kind: output, shape index: {1}]
  %21 = xla_tuple %s19, %s20
  %s22 = sld [smem:[#allocation0]]
  $region177: #{tpu_custom_call.1} parent=0
    _
  %s24 = ssub.s32 1, %s22
  %s25 = scalar_select 0, %s24, %s22
  $region1: #{tpu_custom_call.1} parent=0
    #allocation3 [shape = 'u8[8192]{0}', space=vmem, size = 0x2000, scoped, tag = 'input window, operand 0, single buffered']
    #allocation4 [shape = 's32[2]{0}', space=sflag, size = 0x8, scoped, tag = 'scoped memory for tpu_custom_call.1']
    #allocation5 [shape = 's32[2]{0}', space=sflag, size = 0x8, scoped, tag = 'scoped memory for tpu_custom_call.1']
    #allocation6 [shape = 'u8[65536]{0}', space=vmem, size = 0x10000, scoped, tag = 'input window, operand 1, single buffered']
    #allocation7 [shape = 's32[1]{0}', space=sflag, size = 0x4, scoped, tag = 'scoped memory for tpu_custom_call.1']
    #allocation8 [shape = 'u8[65536]{0}', space=vmem, size = 0x10000, scoped, tag = 'input window, operand 2, single buffered']
    #allocation9 [shape = 'u8[32768]{0}', space=vmem, size = 0x8000, scoped, tag = 'input window, operand 3, single buffered']
    #allocation10 [shape = 's32[1]{0}', space=sflag, size = 0x4, scoped, tag = 'scoped memory for tpu_custom_call.1']
    #allocation11 [shape = 'u8[512]{0}', space=vmem, size = 0x400, scoped, tag = 'input window, operand 4, single buffered']
    #allocation12 [shape = 'u8[196608]{0}', space=vmem, size = 0x30000, scoped, tag = 'input window, operand 5']
    #allocation13 [shape = 's32[2]{0}', space=sflag, size = 0x8, scoped, tag = 'scoped memory for tpu_custom_call.1']
    #allocation14 [shape = 'u8[196608]{0}', space=vmem, size = 0x30000, scoped, tag = 'input window, operand 6']
    #allocation15 [shape = 'u8[1024]{0}', space=vmem, size = 0x400, scoped, tag = 'input window, operand 8']
    #allocation16 [shape = 's32[2]{0}', space=sflag, size = 0x8, scoped, tag = 'scoped memory for tpu_custom_call.1']
    #allocation17 [shape = 'u8[3072]{0}', space=vmem, size = 0xc00, scoped, tag = 'input window, operand 10']
    #allocation18 [shape = 'u8[32768]{0}', space=vmem, size = 0x8000, scoped, tag = 'input window, operand 11, single buffered']
    #allocation19 [shape = 's32[1]{0}', space=sflag, size = 0x4, scoped, tag = 'scoped memory for tpu_custom_call.1']
    #allocation20 [shape = 'u8[32768]{0}', space=vmem, size = 0x8000, scoped, tag = 'input window, operand 13, single buffered']
    #allocation21 [shape = 'u8[32768]{0}', space=vmem, size = 0x8000, scoped, tag = 'input window, operand 15, single buffered']
    #allocation22 [shape = 's32[1]{0}', space=sflag, size = 0x4, scoped, tag = 'scoped memory for tpu_custom_call.1']
    #allocation23 [shape = 'u8[32768]{0}', space=vmem, size = 0x8000, scoped, tag = 'input window, operand 17, single buffered']
    #allocation24 [shape = 'u8[8192]{0}', space=vmem, size = 0x2000, scoped, tag = 'output window, operand 0, single buffered']
    #allocation25 [shape = 'u8[8192]{0}', space=vmem, size = 0x2000, scoped, tag = 'output window, operand 1, single buffered']
    #allocation26 [shape = 's32[1]{0}', space=sflag, size = 0x4, scoped, tag = 'scoped memory for tpu_custom_call.1']
    %26 = vsyncpa [#allocation4], 0
    %27 = vsyncpa [#allocation7], 0
    %28 = vsyncpa [#allocation10], 0
    %29 = vsyncpa [#allocation13], 0
    %s30 = scalar_lea.sflag [#allocation13], 1
    %31 = vsyncpa %s30, 0
    %32 = vsyncpa [#allocation16], 0
    %s33 = scalar_lea.sflag [#allocation16], 1
    %34 = vsyncpa %s33, 0
    %35 = vsyncpa [#allocation19], 0
    %36 = vsyncpa [#allocation22], 0
    %37 = vsyncpa [#allocation5], 0
    %38 = vsyncpa [#allocation26], 0
    loop: start=0, step=1, limit=4
    $region2: #{tpu_custom_call.1} parent=1 // loop_pre_header
      _
    $region3: #{tpu_custom_call.1} parent=1 // loop_header
      %s40 = sphi 0, %s44
      %p41 = scmp.ge.s32.totalorder %s40, 4
      %s47 = sphi 0, %s59
      %s48 = sphi 0, %s55
      %s49 = sphi 0, %s47
      %s50 = sphi 0, %s48
      %s51 = sphi 0, %s49
      %s52 = sphi 0, %s50
      %s62 = sphi 0, %s64
      %s65 = sphi 0, %s62
      %s66 = sphi 0, %s65
      %s82 = sphi 0, %s66
      %s88 = sphi 0, %s90
      %s91 = sphi 0, %s88
      %s92 = sphi 0, %s91
      %s108 = sphi 0, %s92
      %s114 = sphi 0, %s116
      %s117 = sphi 0, %s114
      %s118 = sphi 0, %s117
      %s134 = sphi 0, %s118
      %s138 = sphi 0, %s138
      %s140 = sphi 0, %s138
      %s141 = sphi 0, %s140
      %s155 = sphi 0, %s141
      %s159 = sphi 0, %s159
      %s161 = sphi 0, %s159
      %s162 = sphi 0, %s161
      %s176 = sphi 0, %s162
      %s182 = sphi 0, %s184
      %s185 = sphi 0, %s182
      %s186 = sphi 0, %s185
      %s202 = sphi 0, %s186
      %s208 = sphi 0, %s210
      %s211 = sphi 0, %s208
      %s212 = sphi 0, %s211
      %s228 = sphi 0, %s212
      %s234 = sphi 0, %s236
      %s237 = sphi 0, %s234
      %s238 = sphi 0, %s237
      %s254 = sphi 0, %s238
      %s260 = sphi 0, %s262
      %s263 = sphi 0, %s260
      %s264 = sphi 0, %s263
      %s280 = sphi 0, %s264
      %s286 = sphi 0, %s288
      %s289 = sphi 0, %s286
      %s290 = sphi 0, %s289
      %s306 = sphi 0, %s290
      %s312 = sphi 0, %s314
      %s315 = sphi 0, %s312
      %s316 = sphi 0, %s315
      %s332 = sphi 0, %s316
      %s336 = sphi 0, %s336
      %s338 = sphi 0, %s336
      %s339 = sphi 0, %s338
      %s353 = sphi 0, %s339
      %s357 = sphi 0, %s357
      %s359 = sphi 0, %s357
      %s360 = sphi 0, %s359
      %s374 = sphi 0, %s360
      %s378 = sphi 0, %s378
      %s380 = sphi 0, %s378
      %s381 = sphi 0, %s380
      %s395 = sphi 0, %s381
      %s399 = sphi 0, %s399
      %s401 = sphi 0, %s399
      %s402 = sphi 0, %s401
      %s416 = sphi 0, %s402
      %s420 = sphi 0, %s420
      %s422 = sphi 0, %s420
      %s423 = sphi 0, %s422
      %s437 = sphi 0, %s423
      %s441 = sphi 0, %s441
      %s443 = sphi 0, %s441
      %s444 = sphi 0, %s443
      %s458 = sphi 0, %s444
      %s462 = sphi 0, %s462
      %s464 = sphi 0, %s462
      %s465 = sphi 0, %s464
      %s479 = sphi 0, %s465
      %s483 = sphi 0, %s483
      %s485 = sphi 0, %s483
      %s486 = sphi 0, %s485
      %s500 = sphi 0, %s486
      %s506 = sphi 0, %s508
      %s509 = sphi 0, %s506
      %s510 = sphi 0, %s509
      %s526 = sphi 0, %s510
      %s532 = sphi 0, %s534
      %s535 = sphi 0, %s532
      %s536 = sphi 0, %s535
      %s552 = sphi 0, %s536
    $region4: #{tpu_custom_call.1} parent=1 // loop_header_branch
      %43 = sbr.rel (%p41) target = $region8
    $region5: #{tpu_custom_call.1} parent=1 // loop_body
      %s45 = ssub.s32 %s40, 1
      %s46 = ssub.s32 %s40, 2
      %s53 = sadd.s32 1, %s48
      %p54 = scmp.ge.s32.totalorder %s53, 2
      %s55 = scalar_select %p54, 0, %s53
      %s56 = sadd.s32 1, %s47
      %s57 = scalar_select %p54, %s56, %s47
      %p58 = scmp.ge.s32.totalorder %s57, 1
      %s59 = scalar_select %p58, 0, %s57
      %s60 = ssub.s32 %s47, %s59
      %p61 = scmp.eq.s32.totalorder %s60, 0
      %s63 = sadd.s32 %s62, 1
      %s64 = scalar_select %p61, %s62, %s63
      %p67 = pneg %p61
      %p68 = scmp.eq.s32.totalorder %s40, 1
      %p69 = por %p67, %p68
      %p70 = scmp.ne.s32.totalorder %s62, %s65
      %p71 = scmp.eq.s32.totalorder %s40, 0
      %p72 = por %p70, %p71
      %p73 = scmp.ne.s32.totalorder %s62, %s65
      %p74 = scmp.eq.s32.totalorder %s45, 1
      %p75 = por %p73, %p74
      %p76 = scmp.ne.s32.totalorder %s65, %s66
      %p77 = scmp.eq.s32.totalorder %s45, 0
      %p78 = por %p76, %p77
      %p79 = scmp.ne.s32.totalorder %s65, %s66
      %p80 = scmp.eq.s32.totalorder %s46, 1
      %p81 = por %p79, %p80
      %p83 = scmp.ne.s32.totalorder %s66, %s82
      %p84 = scmp.eq.s32.totalorder %s46, 0
      %p85 = por %p83, %p84
      %s86 = ssub.s32 %s47, %s59
      %p87 = scmp.eq.s32.totalorder %s86, 0
      %s89 = sadd.s32 %s88, 1
      %s90 = scalar_select %p87, %s88, %s89
      %p93 = pneg %p87
      %p94 = scmp.eq.s32.totalorder %s40, 1
      %p95 = por %p93, %p94
      %p96 = scmp.ne.s32.totalorder %s88, %s91
      %p97 = scmp.eq.s32.totalorder %s40, 0
      %p98 = por %p96, %p97
      %p99 = scmp.ne.s32.totalorder %s88, %s91
      %p100 = scmp.eq.s32.totalorder %s45, 1
      %p101 = por %p99, %p100
      %p102 = scmp.ne.s32.totalorder %s91, %s92
      %p103 = scmp.eq.s32.totalorder %s45, 0
      %p104 = por %p102, %p103
      %p105 = scmp.ne.s32.totalorder %s91, %s92
      %p106 = scmp.eq.s32.totalorder %s46, 1
      %p107 = por %p105, %p106
      %p109 = scmp.ne.s32.totalorder %s92, %s108
      %p110 = scmp.eq.s32.totalorder %s46, 0
      %p111 = por %p109, %p110
      %s112 = ssub.s32 %s47, %s59
      %p113 = scmp.eq.s32.totalorder %s112, 0
      %s115 = sadd.s32 %s114, 1
      %s116 = scalar_select %p113, %s114, %s115
      %p119 = pneg %p113
      %p120 = scmp.eq.s32.totalorder %s40, 1
      %p121 = por %p119, %p120
      %p122 = scmp.ne.s32.totalorder %s114, %s117
      %p123 = scmp.eq.s32.totalorder %s40, 0
      %p124 = por %p122, %p123
      %p125 = scmp.ne.s32.totalorder %s114, %s117
      %p126 = scmp.eq.s32.totalorder %s45, 1
      %p127 = por %p125, %p126
      %p128 = scmp.ne.s32.totalorder %s117, %s118
      %p129 = scmp.eq.s32.totalorder %s45, 0
      %p130 = por %p128, %p129
      %p131 = scmp.ne.s32.totalorder %s117, %s118
      %p132 = scmp.eq.s32.totalorder %s46, 1
      %p133 = por %p131, %p132
      %p135 = scmp.ne.s32.totalorder %s118, %s134
      %p136 = scmp.eq.s32.totalorder %s46, 0
      %p137 = por %p135, %p136
      %s139 = sadd.s32 %s138, 1
      %p142 = scmp.eq.s32.totalorder %s40, 1
      %p143 = scmp.ne.s32.totalorder %s138, %s140
      %p144 = scmp.eq.s32.totalorder %s40, 0
      %p145 = por %p143, %p144
      %p146 = scmp.ne.s32.totalorder %s138, %s140
      %p147 = scmp.eq.s32.totalorder %s45, 1
      %p148 = por %p146, %p147
      %p149 = scmp.ne.s32.totalorder %s140, %s141
      %p150 = scmp.eq.s32.totalorder %s45, 0
      %p151 = por %p149, %p150
      %p152 = scmp.ne.s32.totalorder %s140, %s141
      %p153 = scmp.eq.s32.totalorder %s46, 1
      %p154 = por %p152, %p153
      %p156 = scmp.ne.s32.totalorder %s141, %s155
      %p157 = scmp.eq.s32.totalorder %s46, 0
      %p158 = por %p156, %p157
      %s160 = sadd.s32 %s159, 1
      %p163 = scmp.eq.s32.totalorder %s40, 1
      %p164 = scmp.ne.s32.totalorder %s159, %s161
      %p165 = scmp.eq.s32.totalorder %s40, 0
      %p166 = por %p164, %p165
      %p167 = scmp.ne.s32.totalorder %s159, %s161
      %p168 = scmp.eq.s32.totalorder %s45, 1
      %p169 = por %p167, %p168
      %p170 = scmp.ne.s32.totalorder %s161, %s162
      %p171 = scmp.eq.s32.totalorder %s45, 0
      %p172 = por %p170, %p171
      %p173 = scmp.ne.s32.totalorder %s161, %s162
      %p174 = scmp.eq.s32.totalorder %s46, 1
      %p175 = por %p173, %p174
      %p177 = scmp.ne.s32.totalorder %s162, %s176
      %p178 = scmp.eq.s32.totalorder %s46, 0
      %p179 = por %p177, %p178
      %s180 = ssub.s32 %s48, %s55
      %p181 = scmp.eq.s32.totalorder %s180, 0
      %s183 = sadd.s32 %s182, 1
      %s184 = scalar_select %p181, %s182, %s183
      %p187 = pneg %p181
      %p188 = scmp.eq.s32.totalorder %s40, 1
      %p189 = por %p187, %p188
      %p190 = scmp.ne.s32.totalorder %s182, %s185
      %p191 = scmp.eq.s32.totalorder %s40, 0
      %p192 = por %p190, %p191
      %p193 = scmp.ne.s32.totalorder %s182, %s185
      %p194 = scmp.eq.s32.totalorder %s45, 1
      %p195 = por %p193, %p194
      %p196 = scmp.ne.s32.totalorder %s185, %s186
      %p197 = scmp.eq.s32.totalorder %s45, 0
      %p198 = por %p196, %p197
      %p199 = scmp.ne.s32.totalorder %s185, %s186
      %p200 = scmp.eq.s32.totalorder %s46, 1
      %p201 = por %p199, %p200
      %p203 = scmp.ne.s32.totalorder %s186, %s202
      %p204 = scmp.eq.s32.totalorder %s46, 0
      %p205 = por %p203, %p204
      %s206 = ssub.s32 %s48, %s55
      %p207 = scmp.eq.s32.totalorder %s206, 0
      %s209 = sadd.s32 %s208, 1
      %s210 = scalar_select %p207, %s208, %s209
      %p213 = pneg %p207
      %p214 = scmp.eq.s32.totalorder %s40, 1
      %p215 = por %p213, %p214
      %p216 = scmp.ne.s32.totalorder %s208, %s211
      %p217 = scmp.eq.s32.totalorder %s40, 0
      %p218 = por %p216, %p217
      %p219 = scmp.ne.s32.totalorder %s208, %s211
      %p220 = scmp.eq.s32.totalorder %s45, 1
      %p221 = por %p219, %p220
      %p222 = scmp.ne.s32.totalorder %s211, %s212
      %p223 = scmp.eq.s32.totalorder %s45, 0
      %p224 = por %p222, %p223
      %p225 = scmp.ne.s32.totalorder %s211, %s212
      %p226 = scmp.eq.s32.totalorder %s46, 1
      %p227 = por %p225, %p226
      %p229 = scmp.ne.s32.totalorder %s212, %s228
      %p230 = scmp.eq.s32.totalorder %s46, 0
      %p231 = por %p229, %p230
      %s232 = ssub.s32 %s48, %s55
      %p233 = scmp.eq.s32.totalorder %s232, 0
      %s235 = sadd.s32 %s234, 1
      %s236 = scalar_select %p233, %s234, %s235
      %p239 = pneg %p233
      %p240 = scmp.eq.s32.totalorder %s40, 1
      %p241 = por %p239, %p240
      %p242 = scmp.ne.s32.totalorder %s234, %s237
      %p243 = scmp.eq.s32.totalorder %s40, 0
      %p244 = por %p242, %p243
      %p245 = scmp.ne.s32.totalorder %s234, %s237
      %p246 = scmp.eq.s32.totalorder %s45, 1
      %p247 = por %p245, %p246
      %p248 = scmp.ne.s32.totalorder %s237, %s238
      %p249 = scmp.eq.s32.totalorder %s45, 0
      %p250 = por %p248, %p249
      %p251 = scmp.ne.s32.totalorder %s237, %s238
      %p252 = scmp.eq.s32.totalorder %s46, 1
      %p253 = por %p251, %p252
      %p255 = scmp.ne.s32.totalorder %s238, %s254
      %p256 = scmp.eq.s32.totalorder %s46, 0
      %p257 = por %p255, %p256
      %s258 = ssub.s32 %s48, %s55
      %p259 = scmp.eq.s32.totalorder %s258, 0
      %s261 = sadd.s32 %s260, 1
      %s262 = scalar_select %p259, %s260, %s261
      %p265 = pneg %p259
      %p266 = scmp.eq.s32.totalorder %s40, 1
      %p267 = por %p265, %p266
      %p268 = scmp.ne.s32.totalorder %s260, %s263
      %p269 = scmp.eq.s32.totalorder %s40, 0
      %p270 = por %p268, %p269
      %p271 = scmp.ne.s32.totalorder %s260, %s263
      %p272 = scmp.eq.s32.totalorder %s45, 1
      %p273 = por %p271, %p272
      %p274 = scmp.ne.s32.totalorder %s263, %s264
      %p275 = scmp.eq.s32.totalorder %s45, 0
      %p276 = por %p274, %p275
      %p277 = scmp.ne.s32.totalorder %s263, %s264
      %p278 = scmp.eq.s32.totalorder %s46, 1
      %p279 = por %p277, %p278
      %p281 = scmp.ne.s32.totalorder %s264, %s280
      %p282 = scmp.eq.s32.totalorder %s46, 0
      %p283 = por %p281, %p282
      %s284 = ssub.s32 %s48, %s55
      %p285 = scmp.eq.s32.totalorder %s284, 0
      %s287 = sadd.s32 %s286, 1
      %s288 = scalar_select %p285, %s286, %s287
      %p291 = pneg %p285
      %p292 = scmp.eq.s32.totalorder %s40, 1
      %p293 = por %p291, %p292
      %p294 = scmp.ne.s32.totalorder %s286, %s289
      %p295 = scmp.eq.s32.totalorder %s40, 0
      %p296 = por %p294, %p295
      %p297 = scmp.ne.s32.totalorder %s286, %s289
      %p298 = scmp.eq.s32.totalorder %s45, 1
      %p299 = por %p297, %p298
      %p300 = scmp.ne.s32.totalorder %s289, %s290
      %p301 = scmp.eq.s32.totalorder %s45, 0
      %p302 = por %p300, %p301
      %p303 = scmp.ne.s32.totalorder %s289, %s290
      %p304 = scmp.eq.s32.totalorder %s46, 1
      %p305 = por %p303, %p304
      %p307 = scmp.ne.s32.totalorder %s290, %s306
      %p308 = scmp.eq.s32.totalorder %s46, 0
      %p309 = por %p307, %p308
      %s310 = ssub.s32 %s48, %s55
      %p311 = scmp.eq.s32.totalorder %s310, 0
      %s313 = sadd.s32 %s312, 1
      %s314 = scalar_select %p311, %s312, %s313
      %p317 = pneg %p311
      %p318 = scmp.eq.s32.totalorder %s40, 1
      %p319 = por %p317, %p318
      %p320 = scmp.ne.s32.totalorder %s312, %s315
      %p321 = scmp.eq.s32.totalorder %s40, 0
      %p322 = por %p320, %p321
      %p323 = scmp.ne.s32.totalorder %s312, %s315
      %p324 = scmp.eq.s32.totalorder %s45, 1
      %p325 = por %p323, %p324
      %p326 = scmp.ne.s32.totalorder %s315, %s316
      %p327 = scmp.eq.s32.totalorder %s45, 0
      %p328 = por %p326, %p327
      %p329 = scmp.ne.s32.totalorder %s315, %s316
      %p330 = scmp.eq.s32.totalorder %s46, 1
      %p331 = por %p329, %p330
      %p333 = scmp.ne.s32.totalorder %s316, %s332
      %p334 = scmp.eq.s32.totalorder %s46, 0
      %p335 = por %p333, %p334
      %s337 = sadd.s32 %s336, 1
      %p340 = scmp.eq.s32.totalorder %s40, 1
      %p341 = scmp.ne.s32.totalorder %s336, %s338
      %p342 = scmp.eq.s32.totalorder %s40, 0
      %p343 = por %p341, %p342
      %p344 = scmp.ne.s32.totalorder %s336, %s338
      %p345 = scmp.eq.s32.totalorder %s45, 1
      %p346 = por %p344, %p345
      %p347 = scmp.ne.s32.totalorder %s338, %s339
      %p348 = scmp.eq.s32.totalorder %s45, 0
      %p349 = por %p347, %p348
      %p350 = scmp.ne.s32.totalorder %s338, %s339
      %p351 = scmp.eq.s32.totalorder %s46, 1
      %p352 = por %p350, %p351
      %p354 = scmp.ne.s32.totalorder %s339, %s353
      %p355 = scmp.eq.s32.totalorder %s46, 0
      %p356 = por %p354, %p355
      %s358 = sadd.s32 %s357, 1
      %p361 = scmp.eq.s32.totalorder %s40, 1
      %p362 = scmp.ne.s32.totalorder %s357, %s359
      %p363 = scmp.eq.s32.totalorder %s40, 0
      %p364 = por %p362, %p363
      %p365 = scmp.ne.s32.totalorder %s357, %s359
      %p366 = scmp.eq.s32.totalorder %s45, 1
      %p367 = por %p365, %p366
      %p368 = scmp.ne.s32.totalorder %s359, %s360
      %p369 = scmp.eq.s32.totalorder %s45, 0
      %p370 = por %p368, %p369
      %p371 = scmp.ne.s32.totalorder %s359, %s360
      %p372 = scmp.eq.s32.totalorder %s46, 1
      %p373 = por %p371, %p372
      %p375 = scmp.ne.s32.totalorder %s360, %s374
      %p376 = scmp.eq.s32.totalorder %s46, 0
      %p377 = por %p375, %p376
      %s379 = sadd.s32 %s378, 1
      %p382 = scmp.eq.s32.totalorder %s40, 1
      %p383 = scmp.ne.s32.totalorder %s378, %s380
      %p384 = scmp.eq.s32.totalorder %s40, 0
      %p385 = por %p383, %p384
      %p386 = scmp.ne.s32.totalorder %s378, %s380
      %p387 = scmp.eq.s32.totalorder %s45, 1
      %p388 = por %p386, %p387
      %p389 = scmp.ne.s32.totalorder %s380, %s381
      %p390 = scmp.eq.s32.totalorder %s45, 0
      %p391 = por %p389, %p390
      %p392 = scmp.ne.s32.totalorder %s380, %s381
      %p393 = scmp.eq.s32.totalorder %s46, 1
      %p394 = por %p392, %p393
      %p396 = scmp.ne.s32.totalorder %s381, %s395
      %p397 = scmp.eq.s32.totalorder %s46, 0
      %p398 = por %p396, %p397
      %s400 = sadd.s32 %s399, 1
      %p403 = scmp.eq.s32.totalorder %s40, 1
      %p404 = scmp.ne.s32.totalorder %s399, %s401
      %p405 = scmp.eq.s32.totalorder %s40, 0
      %p406 = por %p404, %p405
      %p407 = scmp.ne.s32.totalorder %s399, %s401
      %p408 = scmp.eq.s32.totalorder %s45, 1
      %p409 = por %p407, %p408
      %p410 = scmp.ne.s32.totalorder %s401, %s402
      %p411 = scmp.eq.s32.totalorder %s45, 0
      %p412 = por %p410, %p411
      %p413 = scmp.ne.s32.totalorder %s401, %s402
      %p414 = scmp.eq.s32.totalorder %s46, 1
      %p415 = por %p413, %p414
      %p417 = scmp.ne.s32.totalorder %s402, %s416
      %p418 = scmp.eq.s32.totalorder %s46, 0
      %p419 = por %p417, %p418
      %s421 = sadd.s32 %s420, 1
      %p424 = scmp.eq.s32.totalorder %s40, 1
      %p425 = scmp.ne.s32.totalorder %s420, %s422
      %p426 = scmp.eq.s32.totalorder %s40, 0
      %p427 = por %p425, %p426
      %p428 = scmp.ne.s32.totalorder %s420, %s422
      %p429 = scmp.eq.s32.totalorder %s45, 1
      %p430 = por %p428, %p429
      %p431 = scmp.ne.s32.totalorder %s422, %s423
      %p432 = scmp.eq.s32.totalorder %s45, 0
      %p433 = por %p431, %p432
      %p434 = scmp.ne.s32.totalorder %s422, %s423
      %p435 = scmp.eq.s32.totalorder %s46, 1
      %p436 = por %p434, %p435
      %p438 = scmp.ne.s32.totalorder %s423, %s437
      %p439 = scmp.eq.s32.totalorder %s46, 0
      %p440 = por %p438, %p439
      %s442 = sadd.s32 %s441, 1
      %p445 = scmp.eq.s32.totalorder %s40, 1
      %p446 = scmp.ne.s32.totalorder %s441, %s443
      %p447 = scmp.eq.s32.totalorder %s40, 0
      %p448 = por %p446, %p447
      %p449 = scmp.ne.s32.totalorder %s441, %s443
      %p450 = scmp.eq.s32.totalorder %s45, 1
      %p451 = por %p449, %p450
      %p452 = scmp.ne.s32.totalorder %s443, %s444
      %p453 = scmp.eq.s32.totalorder %s45, 0
      %p454 = por %p452, %p453
      %p455 = scmp.ne.s32.totalorder %s443, %s444
      %p456 = scmp.eq.s32.totalorder %s46, 1
      %p457 = por %p455, %p456
      %p459 = scmp.ne.s32.totalorder %s444, %s458
      %p460 = scmp.eq.s32.totalorder %s46, 0
      %p461 = por %p459, %p460
      %s463 = sadd.s32 %s462, 1
      %p466 = scmp.eq.s32.totalorder %s40, 1
      %p467 = scmp.ne.s32.totalorder %s462, %s464
      %p468 = scmp.eq.s32.totalorder %s40, 0
      %p469 = por %p467, %p468
      %p470 = scmp.ne.s32.totalorder %s462, %s464
      %p471 = scmp.eq.s32.totalorder %s45, 1
      %p472 = por %p470, %p471
      %p473 = scmp.ne.s32.totalorder %s464, %s465
      %p474 = scmp.eq.s32.totalorder %s45, 0
      %p475 = por %p473, %p474
      %p476 = scmp.ne.s32.totalorder %s464, %s465
      %p477 = scmp.eq.s32.totalorder %s46, 1
      %p478 = por %p476, %p477
      %p480 = scmp.ne.s32.totalorder %s465, %s479
      %p481 = scmp.eq.s32.totalorder %s46, 0
      %p482 = por %p480, %p481
      %s484 = sadd.s32 %s483, 1
      %p487 = scmp.eq.s32.totalorder %s40, 1
      %p488 = scmp.ne.s32.totalorder %s483, %s485
      %p489 = scmp.eq.s32.totalorder %s40, 0
      %p490 = por %p488, %p489
      %p491 = scmp.ne.s32.totalorder %s483, %s485
      %p492 = scmp.eq.s32.totalorder %s45, 1
      %p493 = por %p491, %p492
      %p494 = scmp.ne.s32.totalorder %s485, %s486
      %p495 = scmp.eq.s32.totalorder %s45, 0
      %p496 = por %p494, %p495
      %p497 = scmp.ne.s32.totalorder %s485, %s486
      %p498 = scmp.eq.s32.totalorder %s46, 1
      %p499 = por %p497, %p498
      %p501 = scmp.ne.s32.totalorder %s486, %s500
      %p502 = scmp.eq.s32.totalorder %s46, 0
      %p503 = por %p501, %p502
      %s504 = ssub.s32 %s47, %s59
      %p505 = scmp.eq.s32.totalorder %s504, 0
      %s507 = sadd.s32 %s506, 1
      %s508 = scalar_select %p505, %s506, %s507
      %p511 = pneg %p505
      %p512 = scmp.eq.s32.totalorder %s40, 1
      %p513 = por %p511, %p512
      %p514 = scmp.ne.s32.totalorder %s506, %s509
      %p515 = scmp.eq.s32.totalorder %s40, 0
      %p516 = por %p514, %p515
      %p517 = scmp.ne.s32.totalorder %s506, %s509
      %p518 = scmp.eq.s32.totalorder %s45, 1
      %p519 = por %p517, %p518
      %p520 = scmp.ne.s32.totalorder %s509, %s510
      %p521 = scmp.eq.s32.totalorder %s45, 0
      %p522 = por %p520, %p521
      %p523 = scmp.ne.s32.totalorder %s509, %s510
      %p524 = scmp.eq.s32.totalorder %s46, 1
      %p525 = por %p523, %p524
      %p527 = scmp.ne.s32.totalorder %s510, %s526
      %p528 = scmp.eq.s32.totalorder %s46, 0
      %p529 = por %p527, %p528
      %s530 = ssub.s32 %s47, %s59
      %p531 = scmp.eq.s32.totalorder %s530, 0
      %s533 = sadd.s32 %s532, 1
      %s534 = scalar_select %p531, %s532, %s533
      %p537 = pneg %p531
      %p538 = scmp.eq.s32.totalorder %s40, 1
      %p539 = por %p537, %p538
      %p540 = scmp.ne.s32.totalorder %s532, %s535
      %p541 = scmp.eq.s32.totalorder %s40, 0
      %p542 = por %p540, %p541
      %p543 = scmp.ne.s32.totalorder %s532, %s535
      %p544 = scmp.eq.s32.totalorder %s45, 1
      %p545 = por %p543, %p544
      %p546 = scmp.ne.s32.totalorder %s535, %s536
      %p547 = scmp.eq.s32.totalorder %s45, 0
      %p548 = por %p546, %p547
      %p549 = scmp.ne.s32.totalorder %s535, %s536
      %p550 = scmp.eq.s32.totalorder %s46, 1
      %p551 = por %p549, %p550
      %p553 = scmp.ne.s32.totalorder %s536, %s552
      %p554 = scmp.eq.s32.totalorder %s46, 0
      %p555 = por %p553, %p554
      %p556 = scmp.le.s32.totalorder 1, %s40
      %p557 = scmp.lt.s32.totalorder %s40, 3
      %p558 = pnand %p556, %p557
      %p559 = pneg %p558
      // Predicated region
      $region9: #{tpu_custom_call.1} parent=5 // pred_check
        _
      $region10: #{tpu_custom_call.1} parent=5 // pred_check_branch
        %561 = sbr.rel (%p558) target = $region12
      $region11: #{tpu_custom_call.1} parent=5 // pred_region
        %s562 = ssub.s32 %s40, 1
        // Predicated region
        $region13: #{tpu_custom_call.1} parent=11 // pred_check
          %p563 = pneg %p78
        $region14: #{tpu_custom_call.1} parent=11 // pred_check_branch
          %565 = sbr.rel (%p563) target = $region16
        $region15: #{tpu_custom_call.1} parent=11 // pred_region
          %s566 = smul.u32 2, %s49
          %568 = vsyncadd [#allocation4], 0
          %s569 = smul.addr %s566, 8
          %s570 = scalar_lea.hbm %s0, %s569
          %s571 = sshll.u32 %s570, 4
          %s572 = int_to_ptr.hbm [resolvable:$true] %s571
          %s573 = sshll.u32 [#allocation3], 4
          %s574 = int_to_ptr.vmem [resolvable:$true] %s573
          %579 = dma.hbm_to_vmem [thread:$0]  %s572, 256, %s574, [#allocation4], 128, 128, 8
        $region16: #{tpu_custom_call.1} parent=11 // pred_fallthru
          _
        // Predicated region
        $region17: #{tpu_custom_call.1} parent=11 // pred_check
          %p580 = pneg %p104
        $region18: #{tpu_custom_call.1} parent=11 // pred_check_branch
          %582 = sbr.rel (%p580) target = $region20
        $region19: #{tpu_custom_call.1} parent=11 // pred_region
          %s583 = smul.u32 2, %s49
          %585 = vsyncadd [#allocation7], 0
          %s586 = smul.addr %s583, 16
          %s587 = smul.addr %s586, 4
          %s588 = scalar_lea.hbm %s1, %s587
          %s589 = sshll.u32 %s588, 4
          %s590 = int_to_ptr.hbm [resolvable:$true] %s589
          %s591 = sshll.u32 [#allocation6], 4
          %s592 = int_to_ptr.vmem [resolvable:$true] %s591
          %597 = dma.hbm_to_vmem [thread:$0]  %s590, 2048, %s592, [#allocation7], 64, 64, 4
        $region20: #{tpu_custom_call.1} parent=11 // pred_fallthru
          _
        // Predicated region
        $region21: #{tpu_custom_call.1} parent=11 // pred_check
          %p598 = pneg %p130
        $region22: #{tpu_custom_call.1} parent=11 // pred_check_branch
          %600 = sbr.rel (%p598) target = $region24
        $region23: #{tpu_custom_call.1} parent=11 // pred_region
          %s601 = smul.u32 2, %s49
          %603 = vsyncadd [#allocation7], 0
          %s604 = smul.addr %s601, 16
          %s605 = smul.addr %s604, 4
          %s606 = scalar_lea.hbm %s2, %s605
          %s607 = sshll.u32 %s606, 4
          %s608 = int_to_ptr.hbm [resolvable:$true] %s607
          %s609 = sshll.u32 [#allocation8], 4
          %s610 = int_to_ptr.vmem [resolvable:$true] %s609
          %615 = dma.hbm_to_vmem [thread:$0]  %s608, 2048, %s610, [#allocation7], 64, 64, 4
        $region24: #{tpu_custom_call.1} parent=11 // pred_fallthru
          _
        // Predicated region
        $region25: #{tpu_custom_call.1} parent=11 // pred_check
          %p616 = pneg %p151
        $region26: #{tpu_custom_call.1} parent=11 // pred_check_branch
          %618 = sbr.rel (%p616) target = $region28
        $region27: #{tpu_custom_call.1} parent=11 // pred_region
          %620 = vsyncadd [#allocation10], 0
          %s621 = sshll.u32 %s3, 4
          %s622 = int_to_ptr.hbm [resolvable:$true] %s621
          %s623 = sshll.u32 [#allocation9], 4
          %s624 = int_to_ptr.vmem [resolvable:$true] %s623
          %629 = dma.hbm_to_vmem [thread:$0]  %s622, 1024, %s624, [#allocation10], 64, 64, 4
        $region28: #{tpu_custom_call.1} parent=11 // pred_fallthru
          _
        // Predicated region
        $region29: #{tpu_custom_call.1} parent=11 // pred_check
          %p630 = pneg %p172
        $region30: #{tpu_custom_call.1} parent=11 // pred_check_branch
          %632 = sbr.rel (%p630) target = $region32
        $region31: #{tpu_custom_call.1} parent=11 // pred_region
          %634 = vsyncadd [#allocation10], 0
          %s636 = sshll.u32 %s4, 4
          %s637 = int_to_ptr.hbm [resolvable:$true] %s636
          %s638 = sshll.u32 [#allocation11], 4
          %s639 = int_to_ptr.vmem [resolvable:$true] %s638
          %641 = dma.hbm_to_vmem [thread:$0]  %s637, 16, %s639, [#allocation10]
        $region32: #{tpu_custom_call.1} parent=11 // pred_fallthru
          _
        // Predicated region
        $region33: #{tpu_custom_call.1} parent=11 // pred_check
          %p642 = pneg %p349
        $region34: #{tpu_custom_call.1} parent=11 // pred_check_branch
          %644 = sbr.rel (%p642) target = $region36
        $region35: #{tpu_custom_call.1} parent=11 // pred_region
          %646 = vsyncadd [#allocation19], 0
          %s647 = sshll.u32 %s11, 4
          %s648 = int_to_ptr.hbm [resolvable:$true] %s647
          %s649 = sshll.u32 [#allocation18], 4
          %s650 = int_to_ptr.vmem [resolvable:$true] %s649
          %655 = dma.hbm_to_vmem [thread:$0]  %s648, 1024, %s650, [#allocation19], 64, 64, 4
        $region36: #{tpu_custom_call.1} parent=11 // pred_fallthru
          _
        // Predicated region
        $region37: #{tpu_custom_call.1} parent=11 // pred_check
          %p656 = pneg %p370
        $region38: #{tpu_custom_call.1} parent=11 // pred_check_branch
          %658 = sbr.rel (%p656) target = $region40
        $region39: #{tpu_custom_call.1} parent=11 // pred_region
          _
        $region40: #{tpu_custom_call.1} parent=11 // pred_fallthru
          _
        // Predicated region
        $region41: #{tpu_custom_call.1} parent=11 // pred_check
          %p659 = pneg %p391
        $region42: #{tpu_custom_call.1} parent=11 // pred_check_branch
          %661 = sbr.rel (%p659) target = $region44
        $region43: #{tpu_custom_call.1} parent=11 // pred_region
          %663 = vsyncadd [#allocation19], 0
          %s664 = sshll.u32 %s13, 4
          %s665 = int_to_ptr.hbm [resolvable:$true] %s664
          %s666 = sshll.u32 [#allocation20], 4
          %s667 = int_to_ptr.vmem [resolvable:$true] %s666
          %672 = dma.hbm_to_vmem [thread:$0]  %s665, 1024, %s667, [#allocation19], 64, 64, 4
        $region44: #{tpu_custom_call.1} parent=11 // pred_fallthru
          _
        // Predicated region
        $region45: #{tpu_custom_call.1} parent=11 // pred_check
          %p673 = pneg %p412
        $region46: #{tpu_custom_call.1} parent=11 // pred_check_branch
          %675 = sbr.rel (%p673) target = $region48
        $region47: #{tpu_custom_call.1} parent=11 // pred_region
          _
        $region48: #{tpu_custom_call.1} parent=11 // pred_fallthru
          _
        // Predicated region
        $region49: #{tpu_custom_call.1} parent=11 // pred_check
          %p676 = pneg %p433
        $region50: #{tpu_custom_call.1} parent=11 // pred_check_branch
          %678 = sbr.rel (%p676) target = $region52
        $region51: #{tpu_custom_call.1} parent=11 // pred_region
          %680 = vsyncadd [#allocation22], 0
          %s681 = sshll.u32 %s15, 4
          %s682 = int_to_ptr.hbm [resolvable:$true] %s681
          %s683 = sshll.u32 [#allocation21], 4
          %s684 = int_to_ptr.vmem [resolvable:$true] %s683
          %689 = dma.hbm_to_vmem [thread:$0]  %s682, 1024, %s684, [#allocation22], 64, 64, 4
        $region52: #{tpu_custom_call.1} parent=11 // pred_fallthru
          _
        // Predicated region
        $region53: #{tpu_custom_call.1} parent=11 // pred_check
          %p690 = pneg %p454
        $region54: #{tpu_custom_call.1} parent=11 // pred_check_branch
          %692 = sbr.rel (%p690) target = $region56
        $region55: #{tpu_custom_call.1} parent=11 // pred_region
          _
        $region56: #{tpu_custom_call.1} parent=11 // pred_fallthru
          _
        // Predicated region
        $region57: #{tpu_custom_call.1} parent=11 // pred_check
          %p693 = pneg %p475
        $region58: #{tpu_custom_call.1} parent=11 // pred_check_branch
          %695 = sbr.rel (%p693) target = $region60
        $region59: #{tpu_custom_call.1} parent=11 // pred_region
          %697 = vsyncadd [#allocation22], 0
          %s698 = sshll.u32 %s17, 4
          %s699 = int_to_ptr.hbm [resolvable:$true] %s698
          %s700 = sshll.u32 [#allocation23], 4
          %s701 = int_to_ptr.vmem [resolvable:$true] %s700
          %706 = dma.hbm_to_vmem [thread:$0]  %s699, 1024, %s701, [#allocation22], 64, 64, 4
        $region60: #{tpu_custom_call.1} parent=11 // pred_fallthru
          _
        // Predicated region
        $region61: #{tpu_custom_call.1} parent=11 // pred_check
          %p707 = pneg %p496
        $region62: #{tpu_custom_call.1} parent=11 // pred_check_branch
          %709 = sbr.rel (%p707) target = $region64
        $region63: #{tpu_custom_call.1} parent=11 // pred_region
          _
        $region64: #{tpu_custom_call.1} parent=11 // pred_fallthru
          _
      $region12: #{tpu_custom_call.1} parent=5 // pred_fallthru
        _
      %p710 = scmp.lt.s32.totalorder %s40, 2
      // Predicated region
      $region65: #{tpu_custom_call.1} parent=5 // pred_check
        %p711 = pneg %p710
      $region66: #{tpu_custom_call.1} parent=5 // pred_check_branch
        %713 = sbr.rel (%p711) target = $region68
      $region67: #{tpu_custom_call.1} parent=5 // pred_region
        // Predicated region
        $region69: #{tpu_custom_call.1} parent=67 // pred_check
          %p714 = pneg %p192
        $region70: #{tpu_custom_call.1} parent=67 // pred_check_branch
          %716 = sbr.rel (%p714) target = $region72
        $region71: #{tpu_custom_call.1} parent=67 // pred_region
          %s717 = sand.u32 %s40, 1
          %s718 = scalar_lea.sflag [#allocation13], %s717
          %s719 = sand.u32 %s182, 1
          %s720 = smul.addr %s719, 192
          %s721 = scalar_lea.vmem [#allocation12], %s720
          %723 = vsyncadd %s718, 0
          %s724 = smul.addr %s48, 48
          %s725 = smul.addr %s724, 4
          %s726 = scalar_lea.hbm %s5, %s725
          %s727 = sshll.u32 %s726, 4
          %s728 = int_to_ptr.hbm [resolvable:$true] %s727
          %s729 = sshll.u32 %s721, 4
          %s730 = int_to_ptr.vmem [resolvable:$true] %s729
          %735 = dma.hbm_to_vmem [thread:$0]  %s728, 3072, %s730, %s718, 64, 64, 4
        $region72: #{tpu_custom_call.1} parent=67 // pred_fallthru
          _
        // Predicated region
        $region73: #{tpu_custom_call.1} parent=67 // pred_check
          %p736 = pneg %p218
        $region74: #{tpu_custom_call.1} parent=67 // pred_check_branch
          %738 = sbr.rel (%p736) target = $region76
        $region75: #{tpu_custom_call.1} parent=67 // pred_region
          %s739 = sand.u32 %s40, 1
          %s740 = scalar_lea.sflag [#allocation13], %s739
          %s741 = sand.u32 %s208, 1
          %s742 = smul.addr %s741, 192
          %s743 = scalar_lea.vmem [#allocation14], %s742
          %745 = vsyncadd %s740, 0
          %s746 = smul.addr %s48, 48
          %s747 = smul.addr %s746, 4
          %s748 = scalar_lea.hbm %s6, %s747
          %s749 = sshll.u32 %s748, 4
          %s750 = int_to_ptr.hbm [resolvable:$true] %s749
          %s751 = sshll.u32 %s743, 4
          %s752 = int_to_ptr.vmem [resolvable:$true] %s751
          %757 = dma.hbm_to_vmem [thread:$0]  %s750, 3072, %s752, %s740, 64, 64, 4
        $region76: #{tpu_custom_call.1} parent=67 // pred_fallthru
          _
        // Predicated region
        $region77: #{tpu_custom_call.1} parent=67 // pred_check
          %p758 = pneg %p244
        $region78: #{tpu_custom_call.1} parent=67 // pred_check_branch
          %760 = sbr.rel (%p758) target = $region80
        $region79: #{tpu_custom_call.1} parent=67 // pred_region
          %p761 = scmp.lt.s32.totalorder %s48, 1
          %s762 = scalar_select %p761, %s48, 1
          %s763 = scalar_lea.vmem %s7, %s762
        $region80: #{tpu_custom_call.1} parent=67 // pred_fallthru
          _
        // Predicated region
        $region81: #{tpu_custom_call.1} parent=67 // pred_check
          %p764 = pneg %p270
        $region82: #{tpu_custom_call.1} parent=67 // pred_check_branch
          %766 = sbr.rel (%p764) target = $region84
        $region83: #{tpu_custom_call.1} parent=67 // pred_region
          %s767 = sand.u32 %s40, 1
          %s768 = scalar_lea.sflag [#allocation16], %s767
          %s769 = sand.u32 %s260, 1
          %s770 = scalar_lea.vmem [#allocation15], %s769
          %772 = vsyncadd %s768, 0
          %s773 = scalar_lea.hbm %s8, %s48
          %s775 = sshll.u32 %s773, 4
          %s776 = int_to_ptr.hbm [resolvable:$true] %s775
          %s777 = sshll.u32 %s770, 4
          %s778 = int_to_ptr.vmem [resolvable:$true] %s777
          %780 = dma.hbm_to_vmem [thread:$0]  %s776, 16, %s778, %s768
        $region84: #{tpu_custom_call.1} parent=67 // pred_fallthru
          _
        // Predicated region
        $region85: #{tpu_custom_call.1} parent=67 // pred_check
          %p781 = pneg %p296
        $region86: #{tpu_custom_call.1} parent=67 // pred_check_branch
          %783 = sbr.rel (%p781) target = $region88
        $region87: #{tpu_custom_call.1} parent=67 // pred_region
          %p784 = scmp.lt.s32.totalorder %s48, 1
          %s785 = scalar_select %p784, %s48, 1
          %s786 = smul.addr %s785, 3
          %s787 = scalar_lea.vmem %s9, %s786
        $region88: #{tpu_custom_call.1} parent=67 // pred_fallthru
          _
        // Predicated region
        $region89: #{tpu_custom_call.1} parent=67 // pred_check
          %p788 = pneg %p322
        $region90: #{tpu_custom_call.1} parent=67 // pred_check_branch
          %790 = sbr.rel (%p788) target = $region92
        $region91: #{tpu_custom_call.1} parent=67 // pred_region
          %s791 = sand.u32 %s40, 1
          %s792 = scalar_lea.sflag [#allocation16], %s791
          %s793 = sand.u32 %s312, 1
          %s794 = smul.addr %s793, 3
          %s795 = scalar_lea.vmem [#allocation17], %s794
          %797 = vsyncadd %s792, 0
          %s798 = smul.addr %s48, 3
          %s799 = scalar_lea.hbm %s10, %s798
          %s800 = sshll.u32 %s799, 4
          %s801 = int_to_ptr.hbm [resolvable:$true] %s800
          %s802 = sshll.u32 %s795, 4
          %s803 = int_to_ptr.vmem [resolvable:$true] %s802
          %808 = dma.hbm_to_vmem [thread:$0]  %s801, 48, %s803, %s792, 16, 16, 1
        $region92: #{tpu_custom_call.1} parent=67 // pred_fallthru
          _
      $region68: #{tpu_custom_call.1} parent=5 // pred_fallthru
        _
      %p809 = scmp.le.s32.totalorder 1, %s40
      %p810 = scmp.lt.s32.totalorder %s40, 3
      %p811 = pnand %p809, %p810
      %p812 = pneg %p811
      // Predicated region
      $region93: #{tpu_custom_call.1} parent=5 // pred_check
        _
      $region94: #{tpu_custom_call.1} parent=5 // pred_check_branch
        %814 = sbr.rel (%p811) target = $region96
      $region95: #{tpu_custom_call.1} parent=5 // pred_region
        %s815 = ssub.s32 %s40, 1
        // Predicated region
        $region97: #{tpu_custom_call.1} parent=95 // pred_check
          %p816 = pneg %p78
        $region98: #{tpu_custom_call.1} parent=95 // pred_check_branch
          %818 = sbr.rel (%p816) target = $region100
        $region99: #{tpu_custom_call.1} parent=95 // pred_region
          %820 = dma.done [#allocation4], 256
        $region100: #{tpu_custom_call.1} parent=95 // pred_fallthru
          _
        // Predicated region
        $region101: #{tpu_custom_call.1} parent=95 // pred_check
          %p821 = pneg %p104
        $region102: #{tpu_custom_call.1} parent=95 // pred_check_branch
          %823 = sbr.rel (%p821) target = $region104
        $region103: #{tpu_custom_call.1} parent=95 // pred_region
          %825 = dma.done [#allocation7], 2048
        $region104: #{tpu_custom_call.1} parent=95 // pred_fallthru
          _
        // Predicated region
        $region105: #{tpu_custom_call.1} parent=95 // pred_check
          %p826 = pneg %p130
        $region106: #{tpu_custom_call.1} parent=95 // pred_check_branch
          %828 = sbr.rel (%p826) target = $region108
        $region107: #{tpu_custom_call.1} parent=95 // pred_region
          %830 = dma.done [#allocation7], 2048
        $region108: #{tpu_custom_call.1} parent=95 // pred_fallthru
          _
        // Predicated region
        $region109: #{tpu_custom_call.1} parent=95 // pred_check
          %p831 = pneg %p151
        $region110: #{tpu_custom_call.1} parent=95 // pred_check_branch
          %833 = sbr.rel (%p831) target = $region112
        $region111: #{tpu_custom_call.1} parent=95 // pred_region
          %835 = dma.done [#allocation10], 1024
        $region112: #{tpu_custom_call.1} parent=95 // pred_fallthru
          _
        // Predicated region
        $region113: #{tpu_custom_call.1} parent=95 // pred_check
          %p836 = pneg %p172
        $region114: #{tpu_custom_call.1} parent=95 // pred_check_branch
          %838 = sbr.rel (%p836) target = $region116
        $region115: #{tpu_custom_call.1} parent=95 // pred_region
          %840 = dma.done [#allocation10], 16
        $region116: #{tpu_custom_call.1} parent=95 // pred_fallthru
          _
        %s841 = sand.u32 %s45, 1
        %s842 = scalar_lea.sflag [#allocation13], %s841
        %s843 = sand.u32 %s185, 1
        %s844 = smul.addr %s843, 192
        %s845 = scalar_lea.vmem [#allocation12], %s844
        // Predicated region
        $region117: #{tpu_custom_call.1} parent=95 // pred_check
          %p846 = pneg %p198
        $region118: #{tpu_custom_call.1} parent=95 // pred_check_branch
          %848 = sbr.rel (%p846) target = $region120
        $region119: #{tpu_custom_call.1} parent=95 // pred_region
          %850 = dma.done %s842, 3072
        $region120: #{tpu_custom_call.1} parent=95 // pred_fallthru
          _
        %s851 = sand.u32 %s45, 1
        %s852 = scalar_lea.sflag [#allocation13], %s851
        %s853 = sand.u32 %s211, 1
        %s854 = smul.addr %s853, 192
        %s855 = scalar_lea.vmem [#allocation14], %s854
        // Predicated region
        $region121: #{tpu_custom_call.1} parent=95 // pred_check
          %p856 = pneg %p224
        $region122: #{tpu_custom_call.1} parent=95 // pred_check_branch
          %858 = sbr.rel (%p856) target = $region124
        $region123: #{tpu_custom_call.1} parent=95 // pred_region
          %860 = dma.done %s852, 3072
        $region124: #{tpu_custom_call.1} parent=95 // pred_fallthru
          _
        %s861 = sand.u32 %s45, 1
        %s862 = scalar_lea.sflag [#allocation16], %s861
        %s863 = sand.u32 %s263, 1
        %s864 = scalar_lea.vmem [#allocation15], %s863
        // Predicated region
        $region125: #{tpu_custom_call.1} parent=95 // pred_check
          %p865 = pneg %p276
        $region126: #{tpu_custom_call.1} parent=95 // pred_check_branch
          %867 = sbr.rel (%p865) target = $region128
        $region127: #{tpu_custom_call.1} parent=95 // pred_region
          %869 = dma.done %s862, 16
        $region128: #{tpu_custom_call.1} parent=95 // pred_fallthru
          _
        %s870 = sand.u32 %s45, 1
        %s871 = scalar_lea.sflag [#allocation16], %s870
        %s872 = sand.u32 %s315, 1
        %s873 = smul.addr %s872, 3
        %s874 = scalar_lea.vmem [#allocation17], %s873
        // Predicated region
        $region129: #{tpu_custom_call.1} parent=95 // pred_check
          %p875 = pneg %p328
        $region130: #{tpu_custom_call.1} parent=95 // pred_check_branch
          %877 = sbr.rel (%p875) target = $region132
        $region131: #{tpu_custom_call.1} parent=95 // pred_region
          %879 = dma.done %s871, 48
        $region132: #{tpu_custom_call.1} parent=95 // pred_fallthru
          _
        // Predicated region
        $region133: #{tpu_custom_call.1} parent=95 // pred_check
          %p880 = pneg %p349
        $region134: #{tpu_custom_call.1} parent=95 // pred_check_branch
          %882 = sbr.rel (%p880) target = $region136
        $region135: #{tpu_custom_call.1} parent=95 // pred_region
          %884 = dma.done [#allocation19], 1024
        $region136: #{tpu_custom_call.1} parent=95 // pred_fallthru
          _
        // Predicated region
        $region137: #{tpu_custom_call.1} parent=95 // pred_check
          %p885 = pneg %p391
        $region138: #{tpu_custom_call.1} parent=95 // pred_check_branch
          %887 = sbr.rel (%p885) target = $region140
        $region139: #{tpu_custom_call.1} parent=95 // pred_region
          %889 = dma.done [#allocation19], 1024
        $region140: #{tpu_custom_call.1} parent=95 // pred_fallthru
          _
        // Predicated region
        $region141: #{tpu_custom_call.1} parent=95 // pred_check
          %p890 = pneg %p433
        $region142: #{tpu_custom_call.1} parent=95 // pred_check_branch
          %892 = sbr.rel (%p890) target = $region144
        $region143: #{tpu_custom_call.1} parent=95 // pred_region
          %894 = dma.done [#allocation22], 1024
        $region144: #{tpu_custom_call.1} parent=95 // pred_fallthru
          _
        // Predicated region
        $region145: #{tpu_custom_call.1} parent=95 // pred_check
          %p895 = pneg %p475
        $region146: #{tpu_custom_call.1} parent=95 // pred_check_branch
          %897 = sbr.rel (%p895) target = $region148
        $region147: #{tpu_custom_call.1} parent=95 // pred_region
          %899 = dma.done [#allocation22], 1024
        $region148: #{tpu_custom_call.1} parent=95 // pred_fallthru
          _
        %p900 = pneg %p78
        %p901 = pneg %p75
        %p902 = pneg %p104
        %p903 = pneg %p101
        %p904 = pneg %p130
        %p905 = pneg %p127
        %p906 = pneg %p151
        %p907 = pneg %p148
        %p908 = pneg %p172
        %p909 = pneg %p169
        %s910 = sand.u32 %s45, 1
        %s911 = scalar_lea.sflag [#allocation13], %s910
        %s912 = sand.u32 %s185, 1
        %s913 = smul.addr %s912, 192
        %s914 = scalar_lea.vmem [#allocation12], %s913
        %p915 = pneg %p198
        %p916 = pneg %p195
        %s917 = sand.u32 %s45, 1
        %s918 = scalar_lea.sflag [#allocation13], %s917
        %s919 = sand.u32 %s211, 1
        %s920 = smul.addr %s919, 192
        %s921 = scalar_lea.vmem [#allocation14], %s920
        %p922 = pneg %p224
        %p923 = pneg %p221
        %p924 = scmp.lt.s32.totalorder %s50, 1
        %s925 = scalar_select %p924, %s50, 1
        %s926 = scalar_lea.vmem %s7, %s925
        %p927 = pneg %p250
        %p928 = pneg %p247
        %s929 = sand.u32 %s45, 1
        %s930 = scalar_lea.sflag [#allocation16], %s929
        %s931 = sand.u32 %s263, 1
        %s932 = scalar_lea.vmem [#allocation15], %s931
        %p933 = pneg %p276
        %p934 = pneg %p273
        %p935 = scmp.lt.s32.totalorder %s50, 1
        %s936 = scalar_select %p935, %s50, 1
        %s937 = smul.addr %s936, 3
        %s938 = scalar_lea.vmem %s9, %s937
        %p939 = pneg %p302
        %p940 = pneg %p299
        %s941 = sand.u32 %s45, 1
        %s942 = scalar_lea.sflag [#allocation16], %s941
        %s943 = sand.u32 %s315, 1
        %s944 = smul.addr %s943, 3
        %s945 = scalar_lea.vmem [#allocation17], %s944
        %p946 = pneg %p328
        %p947 = pneg %p325
        %p948 = pneg %p349
        %p949 = pneg %p346
        %p950 = pneg %p370
        %p951 = pneg %p367
        %p952 = pneg %p391
        %p953 = pneg %p388
        %p954 = pneg %p412
        %p955 = pneg %p409
        %p956 = pneg %p433
        %p957 = pneg %p430
        %p958 = pneg %p454
        %p959 = pneg %p451
        %p960 = pneg %p475
        %p961 = pneg %p472
        %p962 = pneg %p496
        %p963 = pneg %p493
        %p964 = pneg %p522
        %p965 = pneg %p519
        %p966 = pneg %p548
        %p967 = pneg %p545
        %s968 = smul.u32 2, %s49
        %s969 = smul.u32 2, %s49
        %s970 = smul.u32 2, %s49
        %p971 = scmp.lt.s32.totalorder %s50, 1
        %s972 = scalar_select %p971, %s50, 1
        %s973 = scalar_lea.vmem %s7, %s972
        %p974 = scmp.lt.s32.totalorder %s50, 1
        %s975 = scalar_select %p974, %s50, 1
        %s976 = smul.addr %s975, 3
        %s977 = scalar_lea.vmem %s9, %s976
        %s978 = smul.u32 2, %s49
        %s979 = smul.u32 2, %s49
        %v980 = vld [vmem:[#allocation3] sm:$0xff]
        %v981 = vld [vmem:[#allocation3 + $0x8] sm:$0xff]
        %p982 = scmp.eq.s32.totalorder %s50, 0
        // Predicated region
        $region149: #{tpu_custom_call.1} parent=95 // pred_check
          %p983 = pneg %p982
        $region150: #{tpu_custom_call.1} parent=95 // pred_check_branch
          %985 = sbr.rel (%p983) target = $region152
        $region151: #{tpu_custom_call.1} parent=95 // pred_region
          %v986 = vpack.c.bf16 %v981, %v980
          %v987 = vld [vmem:[#allocation9] sm:$0xf]
          %v988 = vld [vmem:[#allocation9 + $0x4] sm:$0xf]
          %v989 = vld [vmem:[#allocation9 + $0x8] sm:$0xf]
          %v990 = vld [vmem:[#allocation9 + $0xc] sm:$0xf]
          %v991 = vld [vmem:[#allocation9 + $0x10] sm:$0xf]
          %v992 = vld [vmem:[#allocation9 + $0x14] sm:$0xf]
          %v993 = vld [vmem:[#allocation9 + $0x18] sm:$0xf]
          %v994 = vld [vmem:[#allocation9 + $0x1c] sm:$0xf]
          %v995 = vld [vmem:[#allocation9 + $0x20] sm:$0xf]
          %v996 = vld [vmem:[#allocation9 + $0x24] sm:$0xf]
          %v997 = vld [vmem:[#allocation9 + $0x28] sm:$0xf]
          %v998 = vld [vmem:[#allocation9 + $0x2c] sm:$0xf]
          %v999 = vld [vmem:[#allocation9 + $0x30] sm:$0xf]
          %v1000 = vld [vmem:[#allocation9 + $0x34] sm:$0xf]
          %v1001 = vld [vmem:[#allocation9 + $0x38] sm:$0xf]
          %v1002 = vld [vmem:[#allocation9 + $0x3c] sm:$0xf]
          %v1003 = vld [vmem:[#allocation11] sm:$0x1]
          %v1005 = vperm.slane %v1003, 0
          %v1023 = vunpack.c.l.b16 %v987
          %v1024 = vunpack.c.l.b16 %v988
          %v1025 = vunpack.c.l.b16 %v989
          %v1026 = vunpack.c.l.b16 %v990
          %v1027 = vunpack.c.l.b16 %v991
          %v1028 = vunpack.c.l.b16 %v992
          %v1029 = vunpack.c.l.b16 %v993
          %v1030 = vunpack.c.l.b16 %v994
          %v1031 = vunpack.c.l.b16 %v995
          %v1032 = vunpack.c.l.b16 %v996
          %v1033 = vunpack.c.l.b16 %v997
          %v1034 = vunpack.c.l.b16 %v998
          %v1035 = vunpack.c.l.b16 %v999
          %v1036 = vunpack.c.l.b16 %v1000
          %v1037 = vunpack.c.l.b16 %v1001
          %v1038 = vunpack.c.l.b16 %v1002
          %v1039 = vpack.c.b16 %v1024, %v1023
          %v1040 = vpack.c.b16 %v1026, %v1025
          %v1041 = vpack.c.b16 %v1028, %v1027
          %v1042 = vpack.c.b16 %v1030, %v1029
          %v1043 = vpack.c.b16 %v1032, %v1031
          %v1044 = vpack.c.b16 %v1034, %v1033
          %v1045 = vpack.c.b16 %v1036, %v1035
          %v1046 = vpack.c.b16 %v1038, %v1037
          %1055 = vmatpush.bf16.msra.mxu0 %v1046
          %1056 = vmatpush.bf16.msra.mxu0 %v1045
          %1057 = vmatpush.bf16.msra.mxu0 %v1044
          %1058 = vmatpush.bf16.msra.mxu0 %v1043
          %1059 = vmatpush.bf16.msra.mxu0 %v1042
          %1060 = vmatpush.bf16.msra.mxu0 %v1041
          %1061 = vmatpush.bf16.msra.mxu0 %v1040
          %1062 = vmatpush.bf16.msra.mxu0 %v1039
          %1063 = vmatmul.bf16.gmra.mxu0 %v986
          %v1064 = vpop.f32.mrf.mxu0
          %v1065 = vadd.f32 %v1005, %v1064
          %v1066 = vpop.f32.mrf.mxu0
          %v1067 = vadd.f32 %v1005, %v1066
          %1068 = vdwg.mxu0
          %1069 = vst [vmem:[#allocation2] sm:$0xff] %v1065
          %1070 = vst [vmem:[#allocation2 + $0x8] sm:$0xff] %v1067
        $region152: #{tpu_custom_call.1} parent=95 // pred_fallthru
          _
        %v1071 = vld [vmem:[#allocation2] sm:$0xff]
        %v1072 = vld [vmem:[#allocation2 + $0x8] sm:$0xff]
        %v1073 = vpack.c.bf16 %v1072, %v1071
        %v1074 = vlaneseq
        %v1075 = vshrl.u32 %v1074, 7
        %v1076 = vld [vmem:[%s845] sm:$0xf]
        %v1077 = vld [vmem:[%s845 + $0x4] sm:$0xf]
        %v1078 = vld [vmem:[%s845 + $0x8] sm:$0xf]
        %v1079 = vld [vmem:[%s845 + $0xc] sm:$0xf]
        %v1080 = vld [vmem:[%s845 + $0x10] sm:$0xf]
        %v1081 = vld [vmem:[%s845 + $0x14] sm:$0xf]
        %v1082 = vld [vmem:[%s845 + $0x18] sm:$0xf]
        %v1083 = vld [vmem:[%s845 + $0x1c] sm:$0xf]
        %v1084 = vld [vmem:[%s845 + $0x20] sm:$0xf]
        %v1085 = vld [vmem:[%s845 + $0x24] sm:$0xf]
        %v1086 = vld [vmem:[%s845 + $0x28] sm:$0xf]
        %v1087 = vld [vmem:[%s845 + $0x2c] sm:$0xf]
        %v1088 = vld [vmem:[%s845 + $0x30] sm:$0xf]
        %v1089 = vld [vmem:[%s845 + $0x34] sm:$0xf]
        %v1090 = vld [vmem:[%s845 + $0x38] sm:$0xf]
        %v1091 = vld [vmem:[%s845 + $0x3c] sm:$0xf]
        %v1108 = vunpack.c.l.b16 %v1076
        %v1109 = vunpack.c.l.b16 %v1077
        %v1110 = vunpack.c.l.b16 %v1078
        %v1111 = vunpack.c.l.b16 %v1079
        %v1112 = vunpack.c.l.b16 %v1080
        %v1113 = vunpack.c.l.b16 %v1081
        %v1114 = vunpack.c.l.b16 %v1082
        %v1115 = vunpack.c.l.b16 %v1083
        %v1116 = vunpack.c.l.b16 %v1084
        %v1117 = vunpack.c.l.b16 %v1085
        %v1118 = vunpack.c.l.b16 %v1086
        %v1119 = vunpack.c.l.b16 %v1087
        %v1120 = vunpack.c.l.b16 %v1088
        %v1121 = vunpack.c.l.b16 %v1089
        %v1122 = vunpack.c.l.b16 %v1090
        %v1123 = vunpack.c.l.b16 %v1091
        %v1124 = vpack.c.b16 %v1109, %v1108
        %v1125 = vpack.c.b16 %v1111, %v1110
        %v1126 = vpack.c.b16 %v1113, %v1112
        %v1127 = vpack.c.b16 %v1115, %v1114
        %v1128 = vpack.c.b16 %v1117, %v1116
        %v1129 = vpack.c.b16 %v1119, %v1118
        %v1130 = vpack.c.b16 %v1121, %v1120
        %v1131 = vpack.c.b16 %v1123, %v1122
        %1140 = vmatpush.bf16.msra.mxu0 %v1131
        %1141 = vmatpush.bf16.msra.mxu0 %v1130
        %1142 = vmatpush.bf16.msra.mxu0 %v1129
        %1143 = vmatpush.bf16.msra.mxu0 %v1128
        %1144 = vmatpush.bf16.msra.mxu0 %v1127
        %1145 = vmatpush.bf16.msra.mxu0 %v1126
        %1146 = vmatpush.bf16.msra.mxu0 %v1125
        %1147 = vmatpush.bf16.msra.mxu0 %v1124
        %1148 = vmatmul.bf16.gmra.mxu0 %v1073
        %v1149 = vpop.f32.mrf.mxu0
        %v1150 = vadd.f32 0.0, %v1149
        %v1151 = vpop.f32.mrf.mxu0
        %v1152 = vadd.f32 0.0, %v1151
        %1153 = vdwg.mxu0
        %v1154 = vrot.slane %v1150, 6
        %v1155 = vrot.slane %v1152, 6
        %vm1156 = vcmp.lt.s32.totalorder %v1075, 2
        %v1157 = vsel %vm1156, %v1154, %v1155
        %v1158 = vsel %vm1156, %v1155, %v1154
        %v1159 = vld [vmem:[%s977] sm:$0x1]
        %v1161 = vperm.slane %v1159, 0
        %v1163 = vsel %vm1156, %v1161, %v1158
        %v1164 = vsel %vm1156, %v1161, %v1157
        %s1165 = scalar_lea.vmem %s845, 64 [#allocation12]
        %v1166 = vld [vmem:[%s1165] sm:$0xf]
        %v1167 = vld [vmem:[%s1165 + $0x4] sm:$0xf]
        %v1168 = vld [vmem:[%s1165 + $0x8] sm:$0xf]
        %v1169 = vld [vmem:[%s1165 + $0xc] sm:$0xf]
        %v1170 = vld [vmem:[%s1165 + $0x10] sm:$0xf]
        %v1171 = vld [vmem:[%s1165 + $0x14] sm:$0xf]
        %v1172 = vld [vmem:[%s1165 + $0x18] sm:$0xf]
        %v1173 = vld [vmem:[%s1165 + $0x1c] sm:$0xf]
        %v1174 = vld [vmem:[%s1165 + $0x20] sm:$0xf]
        %v1175 = vld [vmem:[%s1165 + $0x24] sm:$0xf]
        %v1176 = vld [vmem:[%s1165 + $0x28] sm:$0xf]
        %v1177 = vld [vmem:[%s1165 + $0x2c] sm:$0xf]
        %v1178 = vld [vmem:[%s1165 + $0x30] sm:$0xf]
        %v1179 = vld [vmem:[%s1165 + $0x34] sm:$0xf]
        %v1180 = vld [vmem:[%s1165 + $0x38] sm:$0xf]
        %v1181 = vld [vmem:[%s1165 + $0x3c] sm:$0xf]
        %v1198 = vunpack.c.l.b16 %v1166
        %v1199 = vunpack.c.l.b16 %v1167
        %v1200 = vunpack.c.l.b16 %v1168
        %v1201 = vunpack.c.l.b16 %v1169
        %v1202 = vunpack.c.l.b16 %v1170
        %v1203 = vunpack.c.l.b16 %v1171
        %v1204 = vunpack.c.l.b16 %v1172
        %v1205 = vunpack.c.l.b16 %v1173
        %v1206 = vunpack.c.l.b16 %v1174
        %v1207 = vunpack.c.l.b16 %v1175
        %v1208 = vunpack.c.l.b16 %v1176
        %v1209 = vunpack.c.l.b16 %v1177
        %v1210 = vunpack.c.l.b16 %v1178
        %v1211 = vunpack.c.l.b16 %v1179
        %v1212 = vunpack.c.l.b16 %v1180
        %v1213 = vunpack.c.l.b16 %v1181
        %v1214 = vpack.c.b16 %v1199, %v1198
        %v1215 = vpack.c.b16 %v1201, %v1200
        %v1216 = vpack.c.b16 %v1203, %v1202
        %v1217 = vpack.c.b16 %v1205, %v1204
        %v1218 = vpack.c.b16 %v1207, %v1206
        %v1219 = vpack.c.b16 %v1209, %v1208
        %v1220 = vpack.c.b16 %v1211, %v1210
        %v1221 = vpack.c.b16 %v1213, %v1212
        %1230 = vmatpush.bf16.msra.mxu0 %v1221
        %1231 = vmatpush.bf16.msra.mxu0 %v1220
        %1232 = vmatpush.bf16.msra.mxu0 %v1219
        %1233 = vmatpush.bf16.msra.mxu0 %v1218
        %1234 = vmatpush.bf16.msra.mxu0 %v1217
        %1235 = vmatpush.bf16.msra.mxu0 %v1216
        %1236 = vmatpush.bf16.msra.mxu0 %v1215
        %1237 = vmatpush.bf16.msra.mxu0 %v1214
        %1238 = vmatmul.bf16.gmra.mxu0 %v1073
        %v1239 = vpop.f32.mrf.mxu0
        %v1240 = vadd.f32 0.0, %v1239
        %v1241 = vpop.f32.mrf.mxu0
        %v1242 = vadd.f32 0.0, %v1241
        %1243 = vdwg.mxu0
        %v1244 = vrot.slane %v1240, 7
        %v1245 = vrot.slane %v1242, 7
        %vm1246 = vcmp.lt.s32.totalorder %v1075, 1
        %v1247 = vsel %vm1246, %v1244, %v1245
        %v1248 = vsel %vm1246, %v1245, %v1244
        %s1249 = scalar_lea.vmem %s977, 1
        %v1250 = vld [vmem:[%s1249] sm:$0x1]
        %v1252 = vperm.slane %v1250, 0
        %v1254 = vsel %vm1246, %v1252, %v1248
        %v1255 = vsel %vm1246, %v1252, %v1247
        %v1256 = vadd.f32 %v1163, %v1254
        %v1257 = vadd.f32 %v1164, %v1255
        %s1258 = scalar_lea.vmem %s845, 128 [#allocation12]
        %v1259 = vld [vmem:[%s1258] sm:$0xf]
        %v1260 = vld [vmem:[%s1258 + $0x4] sm:$0xf]
        %v1261 = vld [vmem:[%s1258 + $0x8] sm:$0xf]
        %v1262 = vld [vmem:[%s1258 + $0xc] sm:$0xf]
        %v1263 = vld [vmem:[%s1258 + $0x10] sm:$0xf]
        %v1264 = vld [vmem:[%s1258 + $0x14] sm:$0xf]
        %v1265 = vld [vmem:[%s1258 + $0x18] sm:$0xf]
        %v1266 = vld [vmem:[%s1258 + $0x1c] sm:$0xf]
        %v1267 = vld [vmem:[%s1258 + $0x20] sm:$0xf]
        %v1268 = vld [vmem:[%s1258 + $0x24] sm:$0xf]
        %v1269 = vld [vmem:[%s1258 + $0x28] sm:$0xf]
        %v1270 = vld [vmem:[%s1258 + $0x2c] sm:$0xf]
        %v1271 = vld [vmem:[%s1258 + $0x30] sm:$0xf]
        %v1272 = vld [vmem:[%s1258 + $0x34] sm:$0xf]
        %v1273 = vld [vmem:[%s1258 + $0x38] sm:$0xf]
        %v1274 = vld [vmem:[%s1258 + $0x3c] sm:$0xf]
        %v1291 = vunpack.c.l.b16 %v1259
        %v1292 = vunpack.c.l.b16 %v1260
        %v1293 = vunpack.c.l.b16 %v1261
        %v1294 = vunpack.c.l.b16 %v1262
        %v1295 = vunpack.c.l.b16 %v1263
        %v1296 = vunpack.c.l.b16 %v1264
        %v1297 = vunpack.c.l.b16 %v1265
        %v1298 = vunpack.c.l.b16 %v1266
        %v1299 = vunpack.c.l.b16 %v1267
        %v1300 = vunpack.c.l.b16 %v1268
        %v1301 = vunpack.c.l.b16 %v1269
        %v1302 = vunpack.c.l.b16 %v1270
        %v1303 = vunpack.c.l.b16 %v1271
        %v1304 = vunpack.c.l.b16 %v1272
        %v1305 = vunpack.c.l.b16 %v1273
        %v1306 = vunpack.c.l.b16 %v1274
        %v1307 = vpack.c.b16 %v1292, %v1291
        %v1308 = vpack.c.b16 %v1294, %v1293
        %v1309 = vpack.c.b16 %v1296, %v1295
        %v1310 = vpack.c.b16 %v1298, %v1297
        %v1311 = vpack.c.b16 %v1300, %v1299
        %v1312 = vpack.c.b16 %v1302, %v1301
        %v1313 = vpack.c.b16 %v1304, %v1303
        %v1314 = vpack.c.b16 %v1306, %v1305
        %1323 = vmatpush.bf16.msra.mxu0 %v1314
        %1324 = vmatpush.bf16.msra.mxu0 %v1313
        %1325 = vmatpush.bf16.msra.mxu0 %v1312
        %1326 = vmatpush.bf16.msra.mxu0 %v1311
        %1327 = vmatpush.bf16.msra.mxu0 %v1310
        %1328 = vmatpush.bf16.msra.mxu0 %v1309
        %1329 = vmatpush.bf16.msra.mxu0 %v1308
        %1330 = vmatpush.bf16.msra.mxu0 %v1307
        %1331 = vmatmul.bf16.gmra.mxu0 %v1073
        %v1332 = vpop.f32.mrf.mxu0
        %v1333 = vadd.f32 0.0, %v1332
        %v1334 = vpop.f32.mrf.mxu0
        %v1335 = vadd.f32 0.0, %v1334
        %1336 = vdwg.mxu0
        %v1337 = vadd.f32 %v1256, %v1333
        %v1338 = vadd.f32 %v1257, %v1335
        %v1339 = vld [vmem:[%s973] sm:$0x1]
        %v1341 = vperm.slane %v1339, 0
        %v1343 = vadd.f32 %v1337, %v1341
        %v1344 = vadd.f32 %v1338, %v1341
        %v1345 = vld [vmem:[%s855] sm:$0xf]
        %v1346 = vld [vmem:[%s855 + $0x4] sm:$0xf]
        %v1347 = vld [vmem:[%s855 + $0x8] sm:$0xf]
        %v1348 = vld [vmem:[%s855 + $0xc] sm:$0xf]
        %v1349 = vld [vmem:[%s855 + $0x10] sm:$0xf]
        %v1350 = vld [vmem:[%s855 + $0x14] sm:$0xf]
        %v1351 = vld [vmem:[%s855 + $0x18] sm:$0xf]
        %v1352 = vld [vmem:[%s855 + $0x1c] sm:$0xf]
        %v1353 = vld [vmem:[%s855 + $0x20] sm:$0xf]
        %v1354 = vld [vmem:[%s855 + $0x24] sm:$0xf]
        %v1355 = vld [vmem:[%s855 + $0x28] sm:$0xf]
        %v1356 = vld [vmem:[%s855 + $0x2c] sm:$0xf]
        %v1357 = vld [vmem:[%s855 + $0x30] sm:$0xf]
        %v1358 = vld [vmem:[%s855 + $0x34] sm:$0xf]
        %v1359 = vld [vmem:[%s855 + $0x38] sm:$0xf]
        %v1360 = vld [vmem:[%s855 + $0x3c] sm:$0xf]
        %v1377 = vunpack.c.l.b16 %v1345
        %v1378 = vunpack.c.l.b16 %v1346
        %v1379 = vunpack.c.l.b16 %v1347
        %v1380 = vunpack.c.l.b16 %v1348
        %v1381 = vunpack.c.l.b16 %v1349
        %v1382 = vunpack.c.l.b16 %v1350
        %v1383 = vunpack.c.l.b16 %v1351
        %v1384 = vunpack.c.l.b16 %v1352
        %v1385 = vunpack.c.l.b16 %v1353
        %v1386 = vunpack.c.l.b16 %v1354
        %v1387 = vunpack.c.l.b16 %v1355
        %v1388 = vunpack.c.l.b16 %v1356
        %v1389 = vunpack.c.l.b16 %v1357
        %v1390 = vunpack.c.l.b16 %v1358
        %v1391 = vunpack.c.l.b16 %v1359
        %v1392 = vunpack.c.l.b16 %v1360
        %v1393 = vpack.c.b16 %v1378, %v1377
        %v1394 = vpack.c.b16 %v1380, %v1379
        %v1395 = vpack.c.b16 %v1382, %v1381
        %v1396 = vpack.c.b16 %v1384, %v1383
        %v1397 = vpack.c.b16 %v1386, %v1385
        %v1398 = vpack.c.b16 %v1388, %v1387
        %v1399 = vpack.c.b16 %v1390, %v1389
        %v1400 = vpack.c.b16 %v1392, %v1391
        %1409 = vmatpush.bf16.msra.mxu0 %v1400
        %1410 = vmatpush.bf16.msra.mxu0 %v1399
        %1411 = vmatpush.bf16.msra.mxu0 %v1398
        %1412 = vmatpush.bf16.msra.mxu0 %v1397
        %1413 = vmatpush.bf16.msra.mxu0 %v1396
        %1414 = vmatpush.bf16.msra.mxu0 %v1395
        %1415 = vmatpush.bf16.msra.mxu0 %v1394
        %1416 = vmatpush.bf16.msra.mxu0 %v1393
        %1417 = vmatmul.bf16.gmra.mxu0 %v1073
        %v1418 = vpop.f32.mrf.mxu0
        %v1419 = vadd.f32 0.0, %v1418
        %v1420 = vpop.f32.mrf.mxu0
        %v1421 = vadd.f32 0.0, %v1420
        %1422 = vdwg.mxu0
        %v1423 = vrot.slane %v1419, 6
        %v1424 = vrot.slane %v1421, 6
        %v1425 = vsel %vm1156, %v1423, %v1424
        %v1426 = vsel %vm1156, %v1424, %v1423
        %v1427 = vld [vmem:[%s874] sm:$0x1]
        %v1429 = vperm.slane %v1427, 0
        %v1431 = vsel %vm1156, %v1429, %v1426
        %v1432 = vsel %vm1156, %v1429, %v1425
        %s1433 = scalar_lea.vmem %s855, 64 [#allocation14]
        %v1434 = vld [vmem:[%s1433] sm:$0xf]
        %v1435 = vld [vmem:[%s1433 + $0x4] sm:$0xf]
        %v1436 = vld [vmem:[%s1433 + $0x8] sm:$0xf]
        %v1437 = vld [vmem:[%s1433 + $0xc] sm:$0xf]
        %v1438 = vld [vmem:[%s1433 + $0x10] sm:$0xf]
        %v1439 = vld [vmem:[%s1433 + $0x14] sm:$0xf]
        %v1440 = vld [vmem:[%s1433 + $0x18] sm:$0xf]
        %v1441 = vld [vmem:[%s1433 + $0x1c] sm:$0xf]
        %v1442 = vld [vmem:[%s1433 + $0x20] sm:$0xf]
        %v1443 = vld [vmem:[%s1433 + $0x24] sm:$0xf]
        %v1444 = vld [vmem:[%s1433 + $0x28] sm:$0xf]
        %v1445 = vld [vmem:[%s1433 + $0x2c] sm:$0xf]
        %v1446 = vld [vmem:[%s1433 + $0x30] sm:$0xf]
        %v1447 = vld [vmem:[%s1433 + $0x34] sm:$0xf]
        %v1448 = vld [vmem:[%s1433 + $0x38] sm:$0xf]
        %v1449 = vld [vmem:[%s1433 + $0x3c] sm:$0xf]
        %v1466 = vunpack.c.l.b16 %v1434
        %v1467 = vunpack.c.l.b16 %v1435
        %v1468 = vunpack.c.l.b16 %v1436
        %v1469 = vunpack.c.l.b16 %v1437
        %v1470 = vunpack.c.l.b16 %v1438
        %v1471 = vunpack.c.l.b16 %v1439
        %v1472 = vunpack.c.l.b16 %v1440
        %v1473 = vunpack.c.l.b16 %v1441
        %v1474 = vunpack.c.l.b16 %v1442
        %v1475 = vunpack.c.l.b16 %v1443
        %v1476 = vunpack.c.l.b16 %v1444
        %v1477 = vunpack.c.l.b16 %v1445
        %v1478 = vunpack.c.l.b16 %v1446
        %v1479 = vunpack.c.l.b16 %v1447
        %v1480 = vunpack.c.l.b16 %v1448
        %v1481 = vunpack.c.l.b16 %v1449
        %v1482 = vpack.c.b16 %v1467, %v1466
        %v1483 = vpack.c.b16 %v1469, %v1468
        %v1484 = vpack.c.b16 %v1471, %v1470
        %v1485 = vpack.c.b16 %v1473, %v1472
        %v1486 = vpack.c.b16 %v1475, %v1474
        %v1487 = vpack.c.b16 %v1477, %v1476
        %v1488 = vpack.c.b16 %v1479, %v1478
        %v1489 = vpack.c.b16 %v1481, %v1480
        %1498 = vmatpush.bf16.msra.mxu0 %v1489
        %1499 = vmatpush.bf16.msra.mxu0 %v1488
        %1500 = vmatpush.bf16.msra.mxu0 %v1487
        %1501 = vmatpush.bf16.msra.mxu0 %v1486
        %1502 = vmatpush.bf16.msra.mxu0 %v1485
        %1503 = vmatpush.bf16.msra.mxu0 %v1484
        %1504 = vmatpush.bf16.msra.mxu0 %v1483
        %1505 = vmatpush.bf16.msra.mxu0 %v1482
        %1506 = vmatmul.bf16.gmra.mxu0 %v1073
        %v1507 = vpop.f32.mrf.mxu0
        %v1508 = vadd.f32 0.0, %v1507
        %v1509 = vpop.f32.mrf.mxu0
        %v1510 = vadd.f32 0.0, %v1509
        %1511 = vdwg.mxu0
        %v1512 = vrot.slane %v1508, 7
        %v1513 = vrot.slane %v1510, 7
        %v1514 = vsel %vm1246, %v1512, %v1513
        %v1515 = vsel %vm1246, %v1513, %v1512
        %s1516 = scalar_lea.vmem %s874, 1 [#allocation17]
        %v1517 = vld [vmem:[%s1516] sm:$0x1]
        %v1519 = vperm.slane %v1517, 0
        %v1521 = vsel %vm1246, %v1519, %v1515
        %v1522 = vsel %vm1246, %v1519, %v1514
        %v1523 = vadd.f32 %v1431, %v1521
        %v1524 = vadd.f32 %v1432, %v1522
        %s1525 = scalar_lea.vmem %s855, 128 [#allocation14]
        %v1526 = vld [vmem:[%s1525] sm:$0xf]
        %v1527 = vld [vmem:[%s1525 + $0x4] sm:$0xf]
        %v1528 = vld [vmem:[%s1525 + $0x8] sm:$0xf]
        %v1529 = vld [vmem:[%s1525 + $0xc] sm:$0xf]
        %v1530 = vld [vmem:[%s1525 + $0x10] sm:$0xf]
        %v1531 = vld [vmem:[%s1525 + $0x14] sm:$0xf]
        %v1532 = vld [vmem:[%s1525 + $0x18] sm:$0xf]
        %v1533 = vld [vmem:[%s1525 + $0x1c] sm:$0xf]
        %v1534 = vld [vmem:[%s1525 + $0x20] sm:$0xf]
        %v1535 = vld [vmem:[%s1525 + $0x24] sm:$0xf]
        %v1536 = vld [vmem:[%s1525 + $0x28] sm:$0xf]
        %v1537 = vld [vmem:[%s1525 + $0x2c] sm:$0xf]
        %v1538 = vld [vmem:[%s1525 + $0x30] sm:$0xf]
        %v1539 = vld [vmem:[%s1525 + $0x34] sm:$0xf]
        %v1540 = vld [vmem:[%s1525 + $0x38] sm:$0xf]
        %v1541 = vld [vmem:[%s1525 + $0x3c] sm:$0xf]
        %v1558 = vunpack.c.l.b16 %v1526
        %v1559 = vunpack.c.l.b16 %v1527
        %v1560 = vunpack.c.l.b16 %v1528
        %v1561 = vunpack.c.l.b16 %v1529
        %v1562 = vunpack.c.l.b16 %v1530
        %v1563 = vunpack.c.l.b16 %v1531
        %v1564 = vunpack.c.l.b16 %v1532
        %v1565 = vunpack.c.l.b16 %v1533
        %v1566 = vunpack.c.l.b16 %v1534
        %v1567 = vunpack.c.l.b16 %v1535
        %v1568 = vunpack.c.l.b16 %v1536
        %v1569 = vunpack.c.l.b16 %v1537
        %v1570 = vunpack.c.l.b16 %v1538
        %v1571 = vunpack.c.l.b16 %v1539
        %v1572 = vunpack.c.l.b16 %v1540
        %v1573 = vunpack.c.l.b16 %v1541
        %v1574 = vpack.c.b16 %v1559, %v1558
        %v1575 = vpack.c.b16 %v1561, %v1560
        %v1576 = vpack.c.b16 %v1563, %v1562
        %v1577 = vpack.c.b16 %v1565, %v1564
        %v1578 = vpack.c.b16 %v1567, %v1566
        %v1579 = vpack.c.b16 %v1569, %v1568
        %v1580 = vpack.c.b16 %v1571, %v1570
        %v1581 = vpack.c.b16 %v1573, %v1572
        %1590 = vmatpush.bf16.msra.mxu0 %v1581
        %1591 = vmatpush.bf16.msra.mxu0 %v1580
        %1592 = vmatpush.bf16.msra.mxu0 %v1579
        %1593 = vmatpush.bf16.msra.mxu0 %v1578
        %1594 = vmatpush.bf16.msra.mxu0 %v1577
        %1595 = vmatpush.bf16.msra.mxu0 %v1576
        %1596 = vmatpush.bf16.msra.mxu0 %v1575
        %1597 = vmatpush.bf16.msra.mxu0 %v1574
        %1598 = vmatmul.bf16.gmra.mxu0 %v1073
        %v1599 = vpop.f32.mrf.mxu0
        %v1600 = vadd.f32 0.0, %v1599
        %v1601 = vpop.f32.mrf.mxu0
        %v1602 = vadd.f32 0.0, %v1601
        %1603 = vdwg.mxu0
        %v1604 = vadd.f32 %v1523, %v1600
        %v1605 = vadd.f32 %v1524, %v1602
        %v1606 = vld [vmem:[%s864] sm:$0x1]
        %v1608 = vperm.slane %v1606, 0
        %v1610 = vadd.f32 %v1604, %v1608
        %v1611 = vadd.f32 %v1605, %v1608
        %v1612 = vxor.u32 %v1610, 2147483648
        %v1613 = vxor.u32 %v1611, 2147483648
        %v1614 = vmul.f32 %v1612, 1.442695
        %v1615 = vpow.pop %v1614
        %v1616 = vmul.f32 %v1613, 1.442695
        %v1617 = vpow.pop %v1616
        %v1618 = vadd.f32 %v1615, 1.0
        %v1619 = vadd.f32 %v1617, 1.0
        %v1620 = vrcp.pop %v1618
        %v1621 = vmul.f32 %v1618, %v1620
        %v1622 = vsub.f32 1.0, %v1621
        %v1623 = vmul.f32 %v1620, %v1622
        %v1624 = vadd.f32 %v1620, %v1623
        %vm1625 = vweird.f32 %v1618
        %vm1626 = vweird.f32 %v1620
        %vm1627 = vmor %vm1625, %vm1626
        %v1628 = vsel %vm1627, %v1620, %v1624
        %v1629 = vand.u32 2147483647, %v1618
        %vm1630 = vcmp.eq.f32.partialorder %v1629, 8.507059e+37
        %v1631 = vand.u32 %v1618, 2147483648
        %v1632 = vor.u32 1.1754944e-38, %v1631
        %v1633 = vsel %vm1630, %v1632, %v1628
        %v1634 = vmul.f32 1.0, %v1633
        %v1635 = vrcp.pop %v1619
        %v1636 = vmul.f32 %v1619, %v1635
        %v1637 = vsub.f32 1.0, %v1636
        %v1638 = vmul.f32 %v1635, %v1637
        %v1639 = vadd.f32 %v1635, %v1638
        %vm1640 = vweird.f32 %v1619
        %vm1641 = vweird.f32 %v1635
        %vm1642 = vmor %vm1640, %vm1641
        %v1643 = vsel %vm1642, %v1635, %v1639
        %v1644 = vand.u32 2147483647, %v1619
        %vm1645 = vcmp.eq.f32.partialorder %v1644, 8.507059e+37
        %v1646 = vand.u32 %v1619, 2147483648
        %v1647 = vor.u32 1.1754944e-38, %v1646
        %v1648 = vsel %vm1645, %v1647, %v1643
        %v1649 = vmul.f32 1.0, %v1648
        %v1650 = vmul.f32 %v1343, %v1634
        %v1651 = vmul.f32 %v1344, %v1649
        %v1652 = vpack.c.bf16 %v1651, %v1650
        %v1653 = vld [vmem:[#allocation18] sm:$0xf]
        %v1654 = vld [vmem:[#allocation18 + $0x4] sm:$0xf]
        %v1655 = vld [vmem:[#allocation18 + $0x8] sm:$0xf]
        %v1656 = vld [vmem:[#allocation18 + $0xc] sm:$0xf]
        %v1657 = vld [vmem:[#allocation18 + $0x10] sm:$0xf]
        %v1658 = vld [vmem:[#allocation18 + $0x14] sm:$0xf]
        %v1659 = vld [vmem:[#allocation18 + $0x18] sm:$0xf]
        %v1660 = vld [vmem:[#allocation18 + $0x1c] sm:$0xf]
        %v1661 = vld [vmem:[#allocation18 + $0x20] sm:$0xf]
        %v1662 = vld [vmem:[#allocation18 + $0x24] sm:$0xf]
        %v1663 = vld [vmem:[#allocation18 + $0x28] sm:$0xf]
        %v1664 = vld [vmem:[#allocation18 + $0x2c] sm:$0xf]
        %v1665 = vld [vmem:[#allocation18 + $0x30] sm:$0xf]
        %v1666 = vld [vmem:[#allocation18 + $0x34] sm:$0xf]
        %v1667 = vld [vmem:[#allocation18 + $0x38] sm:$0xf]
        %v1668 = vld [vmem:[#allocation18 + $0x3c] sm:$0xf]
        %v1669 = vld [vmem:[%s12] sm:$0x1]
        %v1671 = vperm.slane %v1669, 0
        %v1689 = vunpack.c.l.b16 %v1653
        %v1690 = vunpack.c.l.b16 %v1654
        %v1691 = vunpack.c.l.b16 %v1655
        %v1692 = vunpack.c.l.b16 %v1656
        %v1693 = vunpack.c.l.b16 %v1657
        %v1694 = vunpack.c.l.b16 %v1658
        %v1695 = vunpack.c.l.b16 %v1659
        %v1696 = vunpack.c.l.b16 %v1660
        %v1697 = vunpack.c.l.b16 %v1661
        %v1698 = vunpack.c.l.b16 %v1662
        %v1699 = vunpack.c.l.b16 %v1663
        %v1700 = vunpack.c.l.b16 %v1664
        %v1701 = vunpack.c.l.b16 %v1665
        %v1702 = vunpack.c.l.b16 %v1666
        %v1703 = vunpack.c.l.b16 %v1667
        %v1704 = vunpack.c.l.b16 %v1668
        %v1705 = vpack.c.b16 %v1690, %v1689
        %v1706 = vpack.c.b16 %v1692, %v1691
        %v1707 = vpack.c.b16 %v1694, %v1693
        %v1708 = vpack.c.b16 %v1696, %v1695
        %v1709 = vpack.c.b16 %v1698, %v1697
        %v1710 = vpack.c.b16 %v1700, %v1699
        %v1711 = vpack.c.b16 %v1702, %v1701
        %v1712 = vpack.c.b16 %v1704, %v1703
        %1721 = vmatpush.bf16.msra.mxu0 %v1712
        %1722 = vmatpush.bf16.msra.mxu0 %v1711
        %1723 = vmatpush.bf16.msra.mxu0 %v1710
        %1724 = vmatpush.bf16.msra.mxu0 %v1709
        %1725 = vmatpush.bf16.msra.mxu0 %v1708
        %1726 = vmatpush.bf16.msra.mxu0 %v1707
        %1727 = vmatpush.bf16.msra.mxu0 %v1706
        %1728 = vmatpush.bf16.msra.mxu0 %v1705
        %1729 = vmatmul.bf16.gmra.mxu0 %v1652
        %v1730 = vpop.f32.mrf.mxu0
        %v1731 = vadd.f32 %v1671, %v1730
        %v1732 = vpop.f32.mrf.mxu0
        %v1733 = vadd.f32 %v1671, %v1732
        %1734 = vdwg.mxu0
        %v1735 = vadd.f32 %v1731, %v980
        %v1736 = vadd.f32 %v1733, %v981
        %v1737 = vmul.f32 %v1735, 0.70710677
        %v1738 = vmul.f32 %v1736, 0.70710677
        %v1739 = vpack.c.bf16 %v1737, %v1737
        %v1740 = vpack.c.bf16 %v1738, %v1738
        %v1741 = vld [vmem:[#allocation6] sm:$0xf]
        %v1742 = vld [vmem:[#allocation6 + $0x4] sm:$0xf]
        %v1743 = vld [vmem:[#allocation6 + $0x8] sm:$0xf]
        %v1744 = vld [vmem:[#allocation6 + $0xc] sm:$0xf]
        %v1745 = vld [vmem:[#allocation6 + $0x10] sm:$0xf]
        %v1746 = vld [vmem:[#allocation6 + $0x14] sm:$0xf]
        %v1747 = vld [vmem:[#allocation6 + $0x18] sm:$0xf]
        %v1748 = vld [vmem:[#allocation6 + $0x1c] sm:$0xf]
        %v1749 = vld [vmem:[#allocation6 + $0x20] sm:$0xf]
        %v1750 = vld [vmem:[#allocation6 + $0x24] sm:$0xf]
        %v1751 = vld [vmem:[#allocation6 + $0x28] sm:$0xf]
        %v1752 = vld [vmem:[#allocation6 + $0x2c] sm:$0xf]
        %v1753 = vld [vmem:[#allocation6 + $0x30] sm:$0xf]
        %v1754 = vld [vmem:[#allocation6 + $0x34] sm:$0xf]
        %v1755 = vld [vmem:[#allocation6 + $0x38] sm:$0xf]
        %v1756 = vld [vmem:[#allocation6 + $0x3c] sm:$0xf]
        %v1757 = vld [vmem:[#allocation6 + $0x40] sm:$0xf]
        %v1758 = vld [vmem:[#allocation6 + $0x44] sm:$0xf]
        %v1759 = vld [vmem:[#allocation6 + $0x48] sm:$0xf]
        %v1760 = vld [vmem:[#allocation6 + $0x4c] sm:$0xf]
        %v1761 = vld [vmem:[#allocation6 + $0x50] sm:$0xf]
        %v1762 = vld [vmem:[#allocation6 + $0x54] sm:$0xf]
        %v1763 = vld [vmem:[#allocation6 + $0x58] sm:$0xf]
        %v1764 = vld [vmem:[#allocation6 + $0x5c] sm:$0xf]
        %v1765 = vld [vmem:[#allocation6 + $0x60] sm:$0xf]
        %v1766 = vld [vmem:[#allocation6 + $0x64] sm:$0xf]
        %v1767 = vld [vmem:[#allocation6 + $0x68] sm:$0xf]
        %v1768 = vld [vmem:[#allocation6 + $0x6c] sm:$0xf]
        %v1769 = vld [vmem:[#allocation6 + $0x70] sm:$0xf]
        %v1770 = vld [vmem:[#allocation6 + $0x74] sm:$0xf]
        %v1771 = vld [vmem:[#allocation6 + $0x78] sm:$0xf]
        %v1772 = vld [vmem:[#allocation6 + $0x7c] sm:$0xf]
        %v1789 = vunpack.c.l.b16 %v1741
        %v1790 = vunpack.c.l.b16 %v1742
        %v1791 = vunpack.c.l.b16 %v1743
        %v1792 = vunpack.c.l.b16 %v1744
        %v1793 = vunpack.c.l.b16 %v1745
        %v1794 = vunpack.c.l.b16 %v1746
        %v1795 = vunpack.c.l.b16 %v1747
        %v1796 = vunpack.c.l.b16 %v1748
        %v1797 = vunpack.c.l.b16 %v1749
        %v1798 = vunpack.c.l.b16 %v1750
        %v1799 = vunpack.c.l.b16 %v1751
        %v1800 = vunpack.c.l.b16 %v1752
        %v1801 = vunpack.c.l.b16 %v1753
        %v1802 = vunpack.c.l.b16 %v1754
        %v1803 = vunpack.c.l.b16 %v1755
        %v1804 = vunpack.c.l.b16 %v1756
        %v1805 = vpack.c.b16 %v1790, %v1789
        %v1806 = vpack.c.b16 %v1792, %v1791
        %v1807 = vpack.c.b16 %v1794, %v1793
        %v1808 = vpack.c.b16 %v1796, %v1795
        %v1809 = vpack.c.b16 %v1798, %v1797
        %v1810 = vpack.c.b16 %v1800, %v1799
        %v1811 = vpack.c.b16 %v1802, %v1801
        %v1812 = vpack.c.b16 %v1804, %v1803
        %1821 = vmatpush.bf16.msra.mxu0 %v1812
        %1822 = vmatpush.bf16.msra.mxu0 %v1811
        %1823 = vmatpush.bf16.msra.mxu0 %v1810
        %1824 = vmatpush.bf16.msra.mxu0 %v1809
        %1825 = vmatpush.bf16.msra.mxu0 %v1808
        %1826 = vmatpush.bf16.msra.mxu0 %v1807
        %1827 = vmatpush.bf16.msra.mxu0 %v1806
        %1828 = vmatpush.bf16.msra.mxu0 %v1805
        %1829 = vmatmul.bf16.gmra.mxu0 %v1739
        %v1830 = vpop.f32.mrf.mxu0
        %v1831 = vadd.f32 0.0, %v1830
        %v1832 = vpop.f32.mrf.mxu0
        %1833 = vdwg.mxu0
        %v1850 = vunpack.c.l.b16 %v1757
        %v1851 = vunpack.c.l.b16 %v1758
        %v1852 = vunpack.c.l.b16 %v1759
        %v1853 = vunpack.c.l.b16 %v1760
        %v1854 = vunpack.c.l.b16 %v1761
        %v1855 = vunpack.c.l.b16 %v1762
        %v1856 = vunpack.c.l.b16 %v1763
        %v1857 = vunpack.c.l.b16 %v1764
        %v1858 = vunpack.c.l.b16 %v1765
        %v1859 = vunpack.c.l.b16 %v1766
        %v1860 = vunpack.c.l.b16 %v1767
        %v1861 = vunpack.c.l.b16 %v1768
        %v1862 = vunpack.c.l.b16 %v1769
        %v1863 = vunpack.c.l.b16 %v1770
        %v1864 = vunpack.c.l.b16 %v1771
        %v1865 = vunpack.c.l.b16 %v1772
        %v1866 = vpack.c.b16 %v1851, %v1850
        %v1867 = vpack.c.b16 %v1853, %v1852
        %v1868 = vpack.c.b16 %v1855, %v1854
        %v1869 = vpack.c.b16 %v1857, %v1856
        %v1870 = vpack.c.b16 %v1859, %v1858
        %v1871 = vpack.c.b16 %v1861, %v1860
        %v1872 = vpack.c.b16 %v1863, %v1862
        %v1873 = vpack.c.b16 %v1865, %v1864
        %1882 = vmatpush.bf16.msra.mxu0 %v1873
        %1883 = vmatpush.bf16.msra.mxu0 %v1872
        %1884 = vmatpush.bf16.msra.mxu0 %v1871
        %1885 = vmatpush.bf16.msra.mxu0 %v1870
        %1886 = vmatpush.bf16.msra.mxu0 %v1869
        %1887 = vmatpush.bf16.msra.mxu0 %v1868
        %1888 = vmatpush.bf16.msra.mxu0 %v1867
        %1889 = vmatpush.bf16.msra.mxu0 %v1866
        %1890 = vmatmul.bf16.gmra.mxu0 %v1740
        %v1891 = vpop.f32.mrf.mxu0
        %v1892 = vadd.f32 0.0, %v1891
        %v1893 = vpop.f32.mrf.mxu0
        %1894 = vdwg.mxu0
        %v1895 = vlaneseq
        %v1896 = vand.u32 %v1895, 127
        %vm1897 = vcmp.lt.s32.totalorder %v1896, 10
        %v1898 = vsel %vm1897, 1, 0
        %vm1899 = vcmp.eq.s32.totalorder %v1898, 1
        %v1900 = vsel %vm1899, %v1831, -1e+30
        %v1901 = vsel %vm1899, %v1892, -1e+30
        %1902 = vmax.xlane.f32.xlu0 %v1900
        %v1903 = vpop.xlane.xlu0 %1902
        %1904 = vmax.xlane.f32.xlu0 %v1901
        %v1905 = vpop.xlane.xlu0 %1904
        %v1906 = vsub.f32 %v1900, %v1903
        %v1907 = vsub.f32 %v1901, %v1905
        %v1908 = vmul.f32 %v1906, 1.442695
        %v1909 = vpow.pop %v1908
        %v1910 = vmul.f32 %v1907, 1.442695
        %v1911 = vpow.pop %v1910
        %1912 = vadd.xlane.f32.xlu0 %v1909
        %v1913 = vpop.xlane.xlu0 %1912
        %1914 = vadd.xlane.f32.xlu0 %v1911
        %v1915 = vpop.xlane.xlu0 %1914
        %v1916 = vrcp.pop %v1913
        %v1917 = vmul.f32 %v1913, %v1916
        %v1918 = vsub.f32 1.0, %v1917
        %v1919 = vmul.f32 %v1916, %v1918
        %v1920 = vadd.f32 %v1916, %v1919
        %vm1921 = vweird.f32 %v1913
        %vm1922 = vweird.f32 %v1916
        %vm1923 = vmor %vm1921, %vm1922
        %v1924 = vsel %vm1923, %v1916, %v1920
        %v1925 = vand.u32 2147483647, %v1913
        %vm1926 = vcmp.eq.f32.partialorder %v1925, 8.507059e+37
        %v1927 = vand.u32 %v1913, 2147483648
        %v1928 = vor.u32 1.1754944e-38, %v1927
        %v1929 = vsel %vm1926, %v1928, %v1924
        %v1930 = vrcp.pop %v1915
        %v1931 = vmul.f32 %v1915, %v1930
        %v1932 = vsub.f32 1.0, %v1931
        %v1933 = vmul.f32 %v1930, %v1932
        %v1934 = vadd.f32 %v1930, %v1933
        %vm1935 = vweird.f32 %v1915
        %vm1936 = vweird.f32 %v1930
        %vm1937 = vmor %vm1935, %vm1936
        %v1938 = vsel %vm1937, %v1930, %v1934
        %v1939 = vand.u32 2147483647, %v1915
        %vm1940 = vcmp.eq.f32.partialorder %v1939, 8.507059e+37
        %v1941 = vand.u32 %v1915, 2147483648
        %v1942 = vor.u32 1.1754944e-38, %v1941
        %v1943 = vsel %vm1940, %v1942, %v1938
        %v1944 = vmul.f32 %v1909, %v1929
        %v1945 = vmul.f32 %v1911, %v1943
        %1946 = vst [vmem:[#allocation25] sm:$0xff] %v1944
        %1947 = vst [vmem:[#allocation25 + $0x8] sm:$0xff] %v1945
        %v1948 = vpack.c.bf16 %v1944, %v1944
        %v1949 = vpack.c.bf16 %v1945, %v1945
        %v1950 = vld [vmem:[#allocation8] sm:$0xf]
        %v1951 = vld [vmem:[#allocation8 + $0x4] sm:$0xf]
        %v1952 = vld [vmem:[#allocation8 + $0x8] sm:$0xf]
        %v1953 = vld [vmem:[#allocation8 + $0xc] sm:$0xf]
        %v1954 = vld [vmem:[#allocation8 + $0x10] sm:$0xf]
        %v1955 = vld [vmem:[#allocation8 + $0x14] sm:$0xf]
        %v1956 = vld [vmem:[#allocation8 + $0x18] sm:$0xf]
        %v1957 = vld [vmem:[#allocation8 + $0x1c] sm:$0xf]
        %v1958 = vld [vmem:[#allocation8 + $0x20] sm:$0xf]
        %v1959 = vld [vmem:[#allocation8 + $0x24] sm:$0xf]
        %v1960 = vld [vmem:[#allocation8 + $0x28] sm:$0xf]
        %v1961 = vld [vmem:[#allocation8 + $0x2c] sm:$0xf]
        %v1962 = vld [vmem:[#allocation8 + $0x30] sm:$0xf]
        %v1963 = vld [vmem:[#allocation8 + $0x34] sm:$0xf]
        %v1964 = vld [vmem:[#allocation8 + $0x38] sm:$0xf]
        %v1965 = vld [vmem:[#allocation8 + $0x3c] sm:$0xf]
        %v1966 = vld [vmem:[#allocation8 + $0x40] sm:$0xf]
        %v1967 = vld [vmem:[#allocation8 + $0x44] sm:$0xf]
        %v1968 = vld [vmem:[#allocation8 + $0x48] sm:$0xf]
        %v1969 = vld [vmem:[#allocation8 + $0x4c] sm:$0xf]
        %v1970 = vld [vmem:[#allocation8 + $0x50] sm:$0xf]
        %v1971 = vld [vmem:[#allocation8 + $0x54] sm:$0xf]
        %v1972 = vld [vmem:[#allocation8 + $0x58] sm:$0xf]
        %v1973 = vld [vmem:[#allocation8 + $0x5c] sm:$0xf]
        %v1974 = vld [vmem:[#allocation8 + $0x60] sm:$0xf]
        %v1975 = vld [vmem:[#allocation8 + $0x64] sm:$0xf]
        %v1976 = vld [vmem:[#allocation8 + $0x68] sm:$0xf]
        %v1977 = vld [vmem:[#allocation8 + $0x6c] sm:$0xf]
        %v1978 = vld [vmem:[#allocation8 + $0x70] sm:$0xf]
        %v1979 = vld [vmem:[#allocation8 + $0x74] sm:$0xf]
        %v1980 = vld [vmem:[#allocation8 + $0x78] sm:$0xf]
        %v1981 = vld [vmem:[#allocation8 + $0x7c] sm:$0xf]
        %v1998 = vunpack.c.l.b16 %v1950
        %v1999 = vunpack.c.l.b16 %v1951
        %v2000 = vunpack.c.l.b16 %v1952
        %v2001 = vunpack.c.l.b16 %v1953
        %v2002 = vunpack.c.l.b16 %v1954
        %v2003 = vunpack.c.l.b16 %v1955
        %v2004 = vunpack.c.l.b16 %v1956
        %v2005 = vunpack.c.l.b16 %v1957
        %v2006 = vunpack.c.l.b16 %v1958
        %v2007 = vunpack.c.l.b16 %v1959
        %v2008 = vunpack.c.l.b16 %v1960
        %v2009 = vunpack.c.l.b16 %v1961
        %v2010 = vunpack.c.l.b16 %v1962
        %v2011 = vunpack.c.l.b16 %v1963
        %v2012 = vunpack.c.l.b16 %v1964
        %v2013 = vunpack.c.l.b16 %v1965
        %v2014 = vpack.c.b16 %v1999, %v1998
        %v2015 = vpack.c.b16 %v2001, %v2000
        %v2016 = vpack.c.b16 %v2003, %v2002
        %v2017 = vpack.c.b16 %v2005, %v2004
        %v2018 = vpack.c.b16 %v2007, %v2006
        %v2019 = vpack.c.b16 %v2009, %v2008
        %v2020 = vpack.c.b16 %v2011, %v2010
        %v2021 = vpack.c.b16 %v2013, %v2012
        %2030 = vmatpush.bf16.msra.mxu0 %v2021
        %2031 = vmatpush.bf16.msra.mxu0 %v2020
        %2032 = vmatpush.bf16.msra.mxu0 %v2019
        %2033 = vmatpush.bf16.msra.mxu0 %v2018
        %2034 = vmatpush.bf16.msra.mxu0 %v2017
        %2035 = vmatpush.bf16.msra.mxu0 %v2016
        %2036 = vmatpush.bf16.msra.mxu0 %v2015
        %2037 = vmatpush.bf16.msra.mxu0 %v2014
        %2038 = vmatmul.bf16.gmra.mxu0 %v1948
        %v2039 = vpop.f32.mrf.mxu0
        %v2040 = vadd.f32 0.0, %v2039
        %v2041 = vpop.f32.mrf.mxu0
        %2042 = vdwg.mxu0
        %v2059 = vunpack.c.l.b16 %v1966
        %v2060 = vunpack.c.l.b16 %v1967
        %v2061 = vunpack.c.l.b16 %v1968
        %v2062 = vunpack.c.l.b16 %v1969
        %v2063 = vunpack.c.l.b16 %v1970
        %v2064 = vunpack.c.l.b16 %v1971
        %v2065 = vunpack.c.l.b16 %v1972
        %v2066 = vunpack.c.l.b16 %v1973
        %v2067 = vunpack.c.l.b16 %v1974
        %v2068 = vunpack.c.l.b16 %v1975
        %v2069 = vunpack.c.l.b16 %v1976
        %v2070 = vunpack.c.l.b16 %v1977
        %v2071 = vunpack.c.l.b16 %v1978
        %v2072 = vunpack.c.l.b16 %v1979
        %v2073 = vunpack.c.l.b16 %v1980
        %v2074 = vunpack.c.l.b16 %v1981
        %v2075 = vpack.c.b16 %v2060, %v2059
        %v2076 = vpack.c.b16 %v2062, %v2061
        %v2077 = vpack.c.b16 %v2064, %v2063
        %v2078 = vpack.c.b16 %v2066, %v2065
        %v2079 = vpack.c.b16 %v2068, %v2067
        %v2080 = vpack.c.b16 %v2070, %v2069
        %v2081 = vpack.c.b16 %v2072, %v2071
        %v2082 = vpack.c.b16 %v2074, %v2073
        %2091 = vmatpush.bf16.msra.mxu0 %v2082
        %2092 = vmatpush.bf16.msra.mxu0 %v2081
        %2093 = vmatpush.bf16.msra.mxu0 %v2080
        %2094 = vmatpush.bf16.msra.mxu0 %v2079
        %2095 = vmatpush.bf16.msra.mxu0 %v2078
        %2096 = vmatpush.bf16.msra.mxu0 %v2077
        %2097 = vmatpush.bf16.msra.mxu0 %v2076
        %2098 = vmatpush.bf16.msra.mxu0 %v2075
        %2099 = vmatmul.bf16.gmra.mxu0 %v1949
        %v2100 = vpop.f32.mrf.mxu0
        %v2101 = vadd.f32 0.0, %v2100
        %v2102 = vpop.f32.mrf.mxu0
        %2103 = vdwg.mxu0
        %v2104 = vpack.c.bf16 %v2101, %v2040
        %v2105 = vld [vmem:[#allocation20] sm:$0xf]
        %v2106 = vld [vmem:[#allocation20 + $0x4] sm:$0xf]
        %v2107 = vld [vmem:[#allocation20 + $0x8] sm:$0xf]
        %v2108 = vld [vmem:[#allocation20 + $0xc] sm:$0xf]
        %v2109 = vld [vmem:[#allocation20 + $0x10] sm:$0xf]
        %v2110 = vld [vmem:[#allocation20 + $0x14] sm:$0xf]
        %v2111 = vld [vmem:[#allocation20 + $0x18] sm:$0xf]
        %v2112 = vld [vmem:[#allocation20 + $0x1c] sm:$0xf]
        %v2113 = vld [vmem:[#allocation20 + $0x20] sm:$0xf]
        %v2114 = vld [vmem:[#allocation20 + $0x24] sm:$0xf]
        %v2115 = vld [vmem:[#allocation20 + $0x28] sm:$0xf]
        %v2116 = vld [vmem:[#allocation20 + $0x2c] sm:$0xf]
        %v2117 = vld [vmem:[#allocation20 + $0x30] sm:$0xf]
        %v2118 = vld [vmem:[#allocation20 + $0x34] sm:$0xf]
        %v2119 = vld [vmem:[#allocation20 + $0x38] sm:$0xf]
        %v2120 = vld [vmem:[#allocation20 + $0x3c] sm:$0xf]
        %v2121 = vld [vmem:[%s14] sm:$0x1]
        %v2123 = vperm.slane %v2121, 0
        %v2141 = vunpack.c.l.b16 %v2105
        %v2142 = vunpack.c.l.b16 %v2106
        %v2143 = vunpack.c.l.b16 %v2107
        %v2144 = vunpack.c.l.b16 %v2108
        %v2145 = vunpack.c.l.b16 %v2109
        %v2146 = vunpack.c.l.b16 %v2110
        %v2147 = vunpack.c.l.b16 %v2111
        %v2148 = vunpack.c.l.b16 %v2112
        %v2149 = vunpack.c.l.b16 %v2113
        %v2150 = vunpack.c.l.b16 %v2114
        %v2151 = vunpack.c.l.b16 %v2115
        %v2152 = vunpack.c.l.b16 %v2116
        %v2153 = vunpack.c.l.b16 %v2117
        %v2154 = vunpack.c.l.b16 %v2118
        %v2155 = vunpack.c.l.b16 %v2119
        %v2156 = vunpack.c.l.b16 %v2120
        %v2157 = vpack.c.b16 %v2142, %v2141
        %v2158 = vpack.c.b16 %v2144, %v2143
        %v2159 = vpack.c.b16 %v2146, %v2145
        %v2160 = vpack.c.b16 %v2148, %v2147
        %v2161 = vpack.c.b16 %v2150, %v2149
        %v2162 = vpack.c.b16 %v2152, %v2151
        %v2163 = vpack.c.b16 %v2154, %v2153
        %v2164 = vpack.c.b16 %v2156, %v2155
        %2173 = vmatpush.bf16.msra.mxu0 %v2164
        %2174 = vmatpush.bf16.msra.mxu0 %v2163
        %2175 = vmatpush.bf16.msra.mxu0 %v2162
        %2176 = vmatpush.bf16.msra.mxu0 %v2161
        %2177 = vmatpush.bf16.msra.mxu0 %v2160
        %2178 = vmatpush.bf16.msra.mxu0 %v2159
        %2179 = vmatpush.bf16.msra.mxu0 %v2158
        %2180 = vmatpush.bf16.msra.mxu0 %v2157
        %2181 = vmatmul.bf16.gmra.mxu0 %v2104
        %v2182 = vpop.f32.mrf.mxu0
        %v2183 = vadd.f32 %v2123, %v2182
        %v2184 = vpop.f32.mrf.mxu0
        %v2185 = vadd.f32 %v2123, %v2184
        %2186 = vdwg.mxu0
        %v2187 = vadd.f32 %v1650, %v2183
        %v2188 = vadd.f32 %v1651, %v2185
        %v2189 = vmul.f32 %v2187, 0.70710677
        %v2190 = vmul.f32 %v2188, 0.70710677
        %v2191 = vadd.f32 %v2189, %v1071
        %v2192 = vadd.f32 %v2190, %v1072
        %v2193 = vmul.f32 %v2191, 0.70710677
        %v2194 = vmul.f32 %v2192, 0.70710677
        %2195 = vst [vmem:[#allocation2] sm:$0xff] %v2193
        %2196 = vst [vmem:[#allocation2 + $0x8] sm:$0xff] %v2194
        %p2197 = scmp.eq.s32.totalorder %s50, 1
        // Predicated region
        $region153: #{tpu_custom_call.1} parent=95 // pred_check
          %p2198 = pneg %p2197
        $region154: #{tpu_custom_call.1} parent=95 // pred_check_branch
          %2200 = sbr.rel (%p2198) target = $region156
        $region155: #{tpu_custom_call.1} parent=95 // pred_region
          %v2201 = vpack.c.bf16 %v2194, %v2193
          %v2202 = vld [vmem:[#allocation21] sm:$0xf]
          %v2203 = vld [vmem:[#allocation21 + $0x4] sm:$0xf]
          %v2204 = vld [vmem:[#allocation21 + $0x8] sm:$0xf]
          %v2205 = vld [vmem:[#allocation21 + $0xc] sm:$0xf]
          %v2206 = vld [vmem:[#allocation21 + $0x10] sm:$0xf]
          %v2207 = vld [vmem:[#allocation21 + $0x14] sm:$0xf]
          %v2208 = vld [vmem:[#allocation21 + $0x18] sm:$0xf]
          %v2209 = vld [vmem:[#allocation21 + $0x1c] sm:$0xf]
          %v2210 = vld [vmem:[#allocation21 + $0x20] sm:$0xf]
          %v2211 = vld [vmem:[#allocation21 + $0x24] sm:$0xf]
          %v2212 = vld [vmem:[#allocation21 + $0x28] sm:$0xf]
          %v2213 = vld [vmem:[#allocation21 + $0x2c] sm:$0xf]
          %v2214 = vld [vmem:[#allocation21 + $0x30] sm:$0xf]
          %v2215 = vld [vmem:[#allocation21 + $0x34] sm:$0xf]
          %v2216 = vld [vmem:[#allocation21 + $0x38] sm:$0xf]
          %v2217 = vld [vmem:[#allocation21 + $0x3c] sm:$0xf]
          %v2218 = vld [vmem:[%s16] sm:$0x1]
          %v2220 = vperm.slane %v2218, 0
          %v2238 = vunpack.c.l.b16 %v2202
          %v2239 = vunpack.c.l.b16 %v2203
          %v2240 = vunpack.c.l.b16 %v2204
          %v2241 = vunpack.c.l.b16 %v2205
          %v2242 = vunpack.c.l.b16 %v2206
          %v2243 = vunpack.c.l.b16 %v2207
          %v2244 = vunpack.c.l.b16 %v2208
          %v2245 = vunpack.c.l.b16 %v2209
          %v2246 = vunpack.c.l.b16 %v2210
          %v2247 = vunpack.c.l.b16 %v2211
          %v2248 = vunpack.c.l.b16 %v2212
          %v2249 = vunpack.c.l.b16 %v2213
          %v2250 = vunpack.c.l.b16 %v2214
          %v2251 = vunpack.c.l.b16 %v2215
          %v2252 = vunpack.c.l.b16 %v2216
          %v2253 = vunpack.c.l.b16 %v2217
          %v2254 = vpack.c.b16 %v2239, %v2238
          %v2255 = vpack.c.b16 %v2241, %v2240
          %v2256 = vpack.c.b16 %v2243, %v2242
          %v2257 = vpack.c.b16 %v2245, %v2244
          %v2258 = vpack.c.b16 %v2247, %v2246
          %v2259 = vpack.c.b16 %v2249, %v2248
          %v2260 = vpack.c.b16 %v2251, %v2250
          %v2261 = vpack.c.b16 %v2253, %v2252
          %2270 = vmatpush.bf16.msra.mxu0 %v2261
          %2271 = vmatpush.bf16.msra.mxu0 %v2260
          %2272 = vmatpush.bf16.msra.mxu0 %v2259
          %2273 = vmatpush.bf16.msra.mxu0 %v2258
          %2274 = vmatpush.bf16.msra.mxu0 %v2257
          %2275 = vmatpush.bf16.msra.mxu0 %v2256
          %2276 = vmatpush.bf16.msra.mxu0 %v2255
          %2277 = vmatpush.bf16.msra.mxu0 %v2254
          %2278 = vmatmul.bf16.gmra.mxu0 %v2201
          %v2279 = vpop.f32.mrf.mxu0
          %v2280 = vadd.f32 %v2220, %v2279
          %v2281 = vpop.f32.mrf.mxu0
          %v2282 = vadd.f32 %v2220, %v2281
          %2283 = vdwg.mxu0
          %v2284 = vpack.c.bf16 %v2282, %v2280
          %v2285 = vld [vmem:[#allocation23] sm:$0xf]
          %v2286 = vld [vmem:[#allocation23 + $0x4] sm:$0xf]
          %v2287 = vld [vmem:[#allocation23 + $0x8] sm:$0xf]
          %v2288 = vld [vmem:[#allocation23 + $0xc] sm:$0xf]
          %v2289 = vld [vmem:[#allocation23 + $0x10] sm:$0xf]
          %v2290 = vld [vmem:[#allocation23 + $0x14] sm:$0xf]
          %v2291 = vld [vmem:[#allocation23 + $0x18] sm:$0xf]
          %v2292 = vld [vmem:[#allocation23 + $0x1c] sm:$0xf]
          %v2293 = vld [vmem:[#allocation23 + $0x20] sm:$0xf]
          %v2294 = vld [vmem:[#allocation23 + $0x24] sm:$0xf]
          %v2295 = vld [vmem:[#allocation23 + $0x28] sm:$0xf]
          %v2296 = vld [vmem:[#allocation23 + $0x2c] sm:$0xf]
          %v2297 = vld [vmem:[#allocation23 + $0x30] sm:$0xf]
          %v2298 = vld [vmem:[#allocation23 + $0x34] sm:$0xf]
          %v2299 = vld [vmem:[#allocation23 + $0x38] sm:$0xf]
          %v2300 = vld [vmem:[#allocation23 + $0x3c] sm:$0xf]
          %v2301 = vld [vmem:[%s18] sm:$0x1]
          %v2303 = vperm.slane %v2301, 0
          %v2321 = vunpack.c.l.b16 %v2285
          %v2322 = vunpack.c.l.b16 %v2286
          %v2323 = vunpack.c.l.b16 %v2287
          %v2324 = vunpack.c.l.b16 %v2288
          %v2325 = vunpack.c.l.b16 %v2289
          %v2326 = vunpack.c.l.b16 %v2290
          %v2327 = vunpack.c.l.b16 %v2291
          %v2328 = vunpack.c.l.b16 %v2292
          %v2329 = vunpack.c.l.b16 %v2293
          %v2330 = vunpack.c.l.b16 %v2294
          %v2331 = vunpack.c.l.b16 %v2295
          %v2332 = vunpack.c.l.b16 %v2296
          %v2333 = vunpack.c.l.b16 %v2297
          %v2334 = vunpack.c.l.b16 %v2298
          %v2335 = vunpack.c.l.b16 %v2299
          %v2336 = vunpack.c.l.b16 %v2300
          %v2337 = vpack.c.b16 %v2322, %v2321
          %v2338 = vpack.c.b16 %v2324, %v2323
          %v2339 = vpack.c.b16 %v2326, %v2325
          %v2340 = vpack.c.b16 %v2328, %v2327
          %v2341 = vpack.c.b16 %v2330, %v2329
          %v2342 = vpack.c.b16 %v2332, %v2331
          %v2343 = vpack.c.b16 %v2334, %v2333
          %v2344 = vpack.c.b16 %v2336, %v2335
          %2353 = vmatpush.bf16.msra.mxu0 %v2344
          %2354 = vmatpush.bf16.msra.mxu0 %v2343
          %2355 = vmatpush.bf16.msra.mxu0 %v2342
          %2356 = vmatpush.bf16.msra.mxu0 %v2341
          %2357 = vmatpush.bf16.msra.mxu0 %v2340
          %2358 = vmatpush.bf16.msra.mxu0 %v2339
          %2359 = vmatpush.bf16.msra.mxu0 %v2338
          %2360 = vmatpush.bf16.msra.mxu0 %v2337
          %2361 = vmatmul.bf16.gmra.mxu0 %v2284
          %v2362 = vpop.f32.mrf.mxu0
          %v2363 = vadd.f32 %v2303, %v2362
          %v2364 = vpop.f32.mrf.mxu0
          %v2365 = vadd.f32 %v2303, %v2364
          %2366 = vdwg.mxu0
          %2367 = vst [vmem:[#allocation24] sm:$0xff] %v2363
          %2368 = vst [vmem:[#allocation24 + $0x8] sm:$0xff] %v2365
        $region156: #{tpu_custom_call.1} parent=95 // pred_fallthru
          _
        // Predicated region
        $region157: #{tpu_custom_call.1} parent=95 // pred_check
          %p2369 = pneg %p519
        $region158: #{tpu_custom_call.1} parent=95 // pred_check_branch
          %2371 = sbr.rel (%p2369) target = $region160
        $region159: #{tpu_custom_call.1} parent=95 // pred_region
          %s2372 = smul.u32 2, %s49
          %2374 = vsyncadd [#allocation5], 0
          %s2375 = smul.addr %s2372, 8
          %s2376 = scalar_lea.hbm %s19, %s2375
          %s2377 = sshll.u32 [#allocation24], 4
          %s2378 = int_to_ptr.vmem [resolvable:$true] %s2377
          %s2379 = sshll.u32 %s2376, 4
          %s2380 = int_to_ptr.hbm [resolvable:$true] %s2379
          %2385 = dma.vmem_to_hbm [thread:$0]  %s2378, 256, %s2380, [#allocation5], 128, 128, 8
        $region160: #{tpu_custom_call.1} parent=95 // pred_fallthru
          _
        // Predicated region
        $region161: #{tpu_custom_call.1} parent=95 // pred_check
          %p2386 = pneg %p545
        $region162: #{tpu_custom_call.1} parent=95 // pred_check_branch
          %2388 = sbr.rel (%p2386) target = $region164
        $region163: #{tpu_custom_call.1} parent=95 // pred_region
          %s2389 = smul.u32 2, %s49
          %2391 = vsyncadd [#allocation26], 0
          %s2392 = smul.addr %s2389, 8
          %s2393 = scalar_lea.hbm %s20, %s2392
          %s2394 = sshll.u32 [#allocation25], 4
          %s2395 = int_to_ptr.vmem [resolvable:$true] %s2394
          %s2396 = sshll.u32 %s2393, 4
          %s2397 = int_to_ptr.hbm [resolvable:$true] %s2396
          %2402 = dma.vmem_to_hbm [thread:$0]  %s2395, 256, %s2397, [#allocation26], 128, 128, 8
        $region164: #{tpu_custom_call.1} parent=95 // pred_fallthru
          _
        // Predicated region
        $region165: #{tpu_custom_call.1} parent=95 // pred_check
          %p2403 = pneg %p519
        $region166: #{tpu_custom_call.1} parent=95 // pred_check_branch
          %2405 = sbr.rel (%p2403) target = $region168
        $region167: #{tpu_custom_call.1} parent=95 // pred_region
          %2407 = dma.done [#allocation5], 256
        $region168: #{tpu_custom_call.1} parent=95 // pred_fallthru
          _
        // Predicated region
        $region169: #{tpu_custom_call.1} parent=95 // pred_check
          %p2408 = pneg %p545
        $region170: #{tpu_custom_call.1} parent=95 // pred_check_branch
          %2410 = sbr.rel (%p2408) target = $region172
        $region171: #{tpu_custom_call.1} parent=95 // pred_region
          %2412 = dma.done [#allocation26], 256
        $region172: #{tpu_custom_call.1} parent=95 // pred_fallthru
          _
      $region96: #{tpu_custom_call.1} parent=5 // pred_fallthru
        _
      %p2413 = scmp.le.s32.totalorder 2, %s40
      // Predicated region
      $region173: #{tpu_custom_call.1} parent=5 // pred_check
        %p2414 = pneg %p2413
      $region174: #{tpu_custom_call.1} parent=5 // pred_check_branch
        %2416 = sbr.rel (%p2414) target = $region176
      $region175: #{tpu_custom_call.1} parent=5 // pred_region
        %s2417 = ssub.s32 %s40, 2
      $region176: #{tpu_custom_call.1} parent=5 // pred_fallthru
        _
    $region6: #{tpu_custom_call.1} parent=1 // loop_footer
      %s44 = sadd.s32 1, %s40
    $region7: #{tpu_custom_call.1} parent=1 // loop_footer_branch
      %39 = sbr.rel target = $region3
    $region8: #{tpu_custom_call.1} parent=1 // loop_exit
      _
    %2418 = vsyncpa [#allocation4], 1
    %s2419 = scalar_lea.sflag [#allocation4], 1
    %2420 = vsyncpa %s2419, 1
    %2421 = vsyncpa [#allocation7], 1
    %2422 = vsyncpa [#allocation10], 1
    %2423 = vsyncpa [#allocation13], 1
    %s2424 = scalar_lea.sflag [#allocation13], 1
    %2425 = vsyncpa %s2424, 1
    %2426 = vsyncpa [#allocation16], 1
    %s2427 = scalar_lea.sflag [#allocation16], 1
    %2428 = vsyncpa %s2427, 1
    %2429 = vsyncpa [#allocation19], 1
    %2430 = vsyncpa [#allocation22], 1
    %2431 = vsyncpa [#allocation5], 1
    %s2432 = scalar_lea.sflag [#allocation5], 1
    %2433 = vsyncpa %s2432, 1
    %2434 = vsyncpa [#allocation26], 1

</llo_original>
